<compile_context>
chip_gen: v6e
topology: v6e:2x2x1
jax: 0.10.0
libtpu: 0.0.40
codegen_flags: <defaults>
</compile_context>

<pallas_src>
import functools

import jax
import jax.numpy as jnp
from jax.experimental import pallas as pl
from jax.experimental.pallas import tpu as pltpu

LN_EPS = 1e-5  # torch.nn.LayerNorm default


# ----------------------------------------------------------------------------
# kernel
# ----------------------------------------------------------------------------
def llm_summary_kernel(entity_ref, llm_ref,
                       win_t_ref, wc_t_ref, b_x_ref,
                       wout_t_ref, b_out_ref,
                       out_ref, *, h_true, matmul_dtype):
    # In-kernel dtype cast: inputs are streamed in their native dtype and cast
    # on idle VPU slots (avoids a separate wrapper-side HBM cast pass).
    entity = entity_ref[...].astype(matmul_dtype)
    llm = llm_ref[...].astype(matmul_dtype)

    # 1+2) input projection + folded attention + merged biases, one expression
    #      so Mosaic can accumulate both matmuls in the MXU result buffer.
    #      (TB, D_in)@(D_in, Hp) + (TB, H)@(H, Hp) + (1, Hp)  -> f32 (TB, Hp)
    x = (jnp.dot(entity, win_t_ref[...], preferred_element_type=jnp.float32)
         + jnp.dot(llm, wc_t_ref[...], preferred_element_type=jnp.float32)
         + b_x_ref[...])

    # 3) LayerNorm over the true hidden dim (biased variance, eps=1e-5).
    h_pad = x.shape[-1]
    if h_pad == h_true:
        mean = jnp.mean(x, axis=-1, keepdims=True)
        xc = x - mean
        var = jnp.mean(xc * xc, axis=-1, keepdims=True)
        xn = xc * jax.lax.rsqrt(var + LN_EPS)
    else:
        # Padded lanes of x are exactly 0 (padded weight columns / bias lanes
        # are 0), so plain sums over H_pad give the true-H statistics.
        inv_h = 1.0 / h_true
        mean = jnp.sum(x, axis=-1, keepdims=True) * inv_h
        var = jnp.maximum(
            jnp.sum(x * x, axis=-1, keepdims=True) * inv_h - mean * mean, 0.0)
        xn = (x - mean) * jax.lax.rsqrt(var + LN_EPS)
        # Padded lanes of xn are nonzero, but the padded K rows of wout_t are
        # zero, so they contribute nothing to the final matmul.

    # 4) output projection; LN affine + final bias pre-folded into the
    #    weights. wout_t has N = true H, so the output needs no lane slicing.
    out_ref[...] = (jnp.dot(xn.astype(wout_t_ref.dtype), wout_t_ref[...],
                            preferred_element_type=jnp.float32)
                    + b_out_ref[...]).astype(out_ref.dtype)


# ----------------------------------------------------------------------------
# one-time parameter preparation (init time, NOT per forward call)
# ----------------------------------------------------------------------------
def prepare_params(params, *, matmul_dtype=jnp.bfloat16, lane_multiple=128):
    # lane_multiple=256 can help v6e/v7x (2x256x256 MXU) for compute-bound H.
    H, D_in = params["w_in"].shape
    H_pad = ((H + lane_multiple - 1) // lane_multiple) * lane_multiple

    win_t = params["w_in"].T                                      # (D_in, H)
    wc_t = params["w_v"].T @ params["w_o"].T                      # (H, H)
    b_c = params["b_v"] @ params["w_o"].T + params["b_o"]         # (H,)
    b_x = params["b_in"] + b_c                                    # (H,)
    wout_t = params["gamma"][:, None] * params["w_out"].T         # (H, H)
    b_out = params["beta"] @ params["w_out"].T + params["b_out"]  # (H,)

    if H_pad != H:
        ph = H_pad - H
        # Only pad the N (lane) dim of win_t / wc_t and the K (row) dim of
        # wout_t: llm and the output stay at true H in HBM (no pad / slice).
        win_t = jnp.pad(win_t, ((0, 0), (0, ph)))
        wc_t = jnp.pad(wc_t, ((0, 0), (0, ph)))
        wout_t = jnp.pad(wout_t, ((0, ph), (0, 0)))
        b_x = jnp.pad(b_x, (0, ph))

    return {
        "win_t": win_t.astype(matmul_dtype),          # (D_in, H_pad)
        "wc_t": wc_t.astype(matmul_dtype),            # (H,    H_pad)
        "wout_t": wout_t.astype(matmul_dtype),        # (H_pad, H)
        "b_x": b_x.reshape(1, H_pad).astype(jnp.float32),
        "b_out": b_out.reshape(1, H).astype(jnp.float32),
        "h_true": H,
        "h_pad": H_pad,
        "d_in": D_in,
        "matmul_dtype": matmul_dtype,
    }


# ----------------------------------------------------------------------------
# block-size / VMEM heuristics
# ----------------------------------------------------------------------------
def _vmem_capacity_bytes():
    try:
        cap = int(getattr(pltpu.get_tpu_info(), "vmem_capacity_bytes", 0))
        if cap > 0:
            return cap
    except Exception:
        pass
    return 64 << 20  # conservative: v7x physical per-core VMEM


def _estimate_vmem_bytes(block_b, D_in, H, H_pad,
                         in_itemsize, out_itemsize, mm_itemsize):
    # single-buffered constant weights/biases
    weights = (D_in * H_pad + H * H_pad + H_pad * H) * mm_itemsize \
        + (H_pad + H) * 4
    # double-buffered batched input / output tiles
    io = 2 * block_b * (D_in + H) * in_itemsize + 2 * block_b * H * out_itemsize
    # ~3 live f32 block_b x H_pad intermediates (x / xc or x*x / xn)
    interm = 3 * block_b * H_pad * 4
    return weights + io + interm


def _pick_block_b(B, D_in, H, H_pad, *, in_itemsize, out_itemsize,
                  mm_itemsize, vmem_budget):
    def fits(b):
        return _estimate_vmem_bytes(b, D_in, H, H_pad, in_itemsize,
                                    out_itemsize, mm_itemsize) <= vmem_budget

    cands = [c for c in (512, 256, 128, 64, 32, 16, 8)
             if B % c == 0 and fits(c)]
    # Target grid depth >= 4 (so each v7x core gets >= 2 pipelined steps) and
    # prefer even grids (balanced megacore split); relax if B is small.
    for min_grid, want_even in ((4, True), (4, False), (2, True),
                                (2, False), (1, False)):
        for c in cands:
            g = B // c
            if g >= min_grid and (not want_even or g % 2 == 0):
                return c
    return B


# ----------------------------------------------------------------------------
# wrapper
# ----------------------------------------------------------------------------
def llm_summary_processor(entity, llm, prep, *, block_b=None, out_dtype=None):
    B, D_in = entity.shape
    H = prep["h_true"]
    H_pad = prep["h_pad"]
    assert llm.shape == (B, H)
    mdt = prep["matmul_dtype"]
    if out_dtype is None:
        # Pass out_dtype=jnp.bfloat16 if downstream tolerates it: the output
        # write is the largest HBM stream in the mem-bound regime.
        out_dtype = entity.dtype

    # VMEM budget from the chip's physical VMEM (v5e/v6e: 128 MiB, v7x: 64
    # MiB), leaving ~20% headroom for compiler scratch and spills.
    vmem_limit = max(32 << 20, int(_vmem_capacity_bytes() * 0.8))

    if block_b is None:
        block_b = _pick_block_b(
            B, D_in, H, H_pad,
            in_itemsize=jnp.dtype(entity.dtype).itemsize,
            out_itemsize=jnp.dtype(out_dtype).itemsize,
            mm_itemsize=jnp.dtype(mdt).itemsize,
            vmem_budget=int(vmem_limit * 0.6))
    assert B % block_b == 0, (B, block_b)
    grid = (B // block_b,)

    # TODO(synk): for very large H on v7x (2*H_pad^2 bf16 weights no longer
    # resident in 64 MiB VMEM), N-tile the output projection (keep xn in VMEM
    # scratch and stream wout_t column tiles via a second grid axis).

    cost = pl.CostEstimate(
        flops=int(2 * B * (D_in * H_pad + H * H_pad + H_pad * H)),
        transcendentals=int(B),
        bytes_accessed=int(
            entity.size * jnp.dtype(entity.dtype).itemsize
            + llm.size * jnp.dtype(llm.dtype).itemsize
            + B * H * jnp.dtype(out_dtype).itemsize
            + (prep["win_t"].size + prep["wc_t"].size + prep["wout_t"].size)
            * jnp.dtype(mdt).itemsize
            + (H_pad + H) * 4))

    def run(single_buffer_weights):
        # Constant-index weight/bias tiles are never re-fetched, so
        # single-buffering them halves their VMEM footprint at zero perf cost.
        wkw = ({"pipeline_mode": pl.Buffered(1)}
               if single_buffer_weights else {})

        def const(a):
            return pl.BlockSpec(a.shape, lambda i: (0,) * a.ndim, **wkw)

        def batched(last):
            return pl.BlockSpec((block_b, last), lambda i: (i, 0))

        return pl.pallas_call(
            functools.partial(llm_summary_kernel, h_true=H, matmul_dtype=mdt),
            out_shape=jax.ShapeDtypeStruct((B, H), out_dtype),
            grid_spec=pltpu.PrefetchScalarGridSpec(
                num_scalar_prefetch=0,
                grid=grid,
                in_specs=[
                    batched(D_in),              # entity tile (native dtype)
                    batched(H),                 # llm tile (native dtype, no pad)
                    const(prep["win_t"]),
                    const(prep["wc_t"]),
                    const(prep["b_x"]),
                    const(prep["wout_t"]),
                    const(prep["b_out"]),
                ],
                out_specs=batched(H),           # true-H output, no slice needed
            ),
            compiler_params=pltpu.CompilerParams(
                dimension_semantics=("parallel",),
                vmem_limit_bytes=vmem_limit),
            cost_estimate=cost,
        )(entity, llm, prep["win_t"], prep["wc_t"], prep["b_x"],
          prep["wout_t"], prep["b_out"])

    try:
        return run(single_buffer_weights=True)
    except Exception:
        # Fallback in case this jax version rejects Buffered(1) specs.
        return run(single_buffer_weights=False)


# ----------------------------------------------------------------------------
# parameter init + pure-JAX reference (mirrors the torch module, f32)
# ----------------------------------------------------------------------------
def init_params(key, input_dim, hidden):
    ks = jax.random.split(key, 8)
    s = 0.05
    return {
        # nn.Linear(input_dim, hidden)
        "w_in": s * jax.random.normal(ks[0], (hidden, input_dim), jnp.float32),
        "b_in": s * jax.random.normal(ks[1], (hidden,), jnp.float32),
        # MultiheadAttention value projection (rows 2H:3H of in_proj_weight)
        "w_v": s * jax.random.normal(ks[2], (hidden, hidden), jnp.float32),
        "b_v": s * jax.random.normal(ks[3], (hidden,), jnp.float32),
        # MultiheadAttention out_proj
        "w_o": s * jax.random.normal(ks[4], (hidden, hidden), jnp.float32),
        "b_o": s * jax.random.normal(ks[5], (hidden,), jnp.float32),
        # LayerNorm
        "gamma": jnp.ones((hidden,), jnp.float32),
        "beta": jnp.zeros((hidden,), jnp.float32),
        # nn.Linear(hidden, hidden)
        "w_out": s * jax.random.normal(ks[6], (hidden, hidden), jnp.float32),
        "b_out": s * jax.random.normal(ks[7], (hidden,), jnp.float32),
    }


def reference(entity, llm, p):
    proj = entity @ p["w_in"].T + p["b_in"]
    v = llm @ p["w_v"].T + p["b_v"]
    attn = v @ p["w_o"].T + p["b_o"]          # softmax over 1 key == 1
    x = attn + proj
    mean = jnp.mean(x, axis=-1, keepdims=True)
    var = jnp.mean((x - mean) ** 2, axis=-1, keepdims=True)
    y = (x - mean) * jax.lax.rsqrt(var + LN_EPS) * p["gamma"] + p["beta"]
    return y @ p["w_out"].T + p["b_out"]


if __name__ == "__main__":
    # Small but multi-tile: B=256 -> block_b=64, grid=(4,), so the BlockSpec
    # pipeline and (on v7x) megacore sharding are exercised.
    B, D_IN, HIDDEN = 256, 32, 128   # hidden divisible by num_heads=8

    key = jax.random.PRNGKey(0)
    k_e, k_l, k_p = jax.random.split(key, 3)
    entity_repr = jax.random.normal(k_e, (B, D_IN), jnp.float32)
    llm_summary_repr = jax.random.normal(k_l, (B, HIDDEN), jnp.float32)
    params = init_params(k_p, D_IN, HIDDEN)

    prep = prepare_params(params)  # one-time weight folding / transposes / casts
    out = llm_summary_processor(entity_repr, llm_summary_repr, prep)
    out = jax.block_until_ready(out)

    ref = reference(entity_repr, llm_summary_repr, params)
    assert out.shape == (B, HIDDEN)
    # bf16 matmul operands with f32 accumulation -> loose-ish tolerance vs f32 ref
    assert jnp.allclose(out, ref, atol=5e-2, rtol=5e-2), float(
        jnp.max(jnp.abs(out - ref)))

    print("KERNEL_OK")
</pallas_src>

<mosaic_0001>
module attributes {stable_mosaic.version = 11 : i64} {
  func.func @llm_summary_kernel(%arg0: i32, %arg1: memref<64x32xf32, #tpu.memory_space<vmem>>, %arg2: memref<64x128xf32, #tpu.memory_space<vmem>>, %arg3: memref<32x128xbf16, #tpu.memory_space<vmem>>, %arg4: memref<128x128xbf16, #tpu.memory_space<vmem>>, %arg5: memref<1x128xf32, #tpu.memory_space<vmem>>, %arg6: memref<128x128xbf16, #tpu.memory_space<vmem>>, %arg7: memref<1x128xf32, #tpu.memory_space<vmem>>, %arg8: memref<64x128xf32, #tpu.memory_space<vmem>>) attributes {dimension_semantics = [#tpu.dimension_semantics<parallel>], iteration_bounds = array<i64: 4>, scalar_prefetch = 0 : i64, scratch_operands = 0 : i64, tpu.core_type = #tpu.core_type<tc>, window_params = [{transform_indices = @transform_0, window_bounds = array<i64: 64, 32>}, {transform_indices = @transform_1, window_bounds = array<i64: 64, 128>}, {pipeline_mode = #tpu.pipeline_mode<synchronous>, transform_indices = @transform_2, window_bounds = array<i64: 32, 128>}, {pipeline_mode = #tpu.pipeline_mode<synchronous>, transform_indices = @transform_3, window_bounds = array<i64: 128, 128>}, {pipeline_mode = #tpu.pipeline_mode<synchronous>, transform_indices = @transform_4, window_bounds = array<i64: 1, 128>}, {pipeline_mode = #tpu.pipeline_mode<synchronous>, transform_indices = @transform_5, window_bounds = array<i64: 128, 128>}, {pipeline_mode = #tpu.pipeline_mode<synchronous>, transform_indices = @transform_6, window_bounds = array<i64: 1, 128>}, {transform_indices = @transform_7, window_bounds = array<i64: 64, 128>}]} {
    %c0 = arith.constant 0 : index
    %c0_0 = arith.constant 0 : index
    %0 = vector.load %arg1[%c0, %c0_0] : memref<64x32xf32, #tpu.memory_space<vmem>>, vector<64x32xf32>
    %1 = arith.truncf %0 : vector<64x32xf32> to vector<64x32xbf16>
    %c0_1 = arith.constant 0 : index
    %c0_2 = arith.constant 0 : index
    %2 = vector.load %arg2[%c0_1, %c0_2] : memref<64x128xf32, #tpu.memory_space<vmem>>, vector<64x128xf32>
    %3 = arith.truncf %2 : vector<64x128xf32> to vector<64x128xbf16>
    %c0_3 = arith.constant 0 : index
    %c0_4 = arith.constant 0 : index
    %4 = vector.load %arg3[%c0_3, %c0_4] : memref<32x128xbf16, #tpu.memory_space<vmem>>, vector<32x128xbf16>
    %cst = arith.constant dense<0.000000e+00> : vector<64x128xf32>
    %5 = tpu.matmul %1, %4, %cst {dimension_numbers = #tpu.dot_dimension_numbers<[1], [0], [0], [1], [0, 0, 1, 1], [], []>} : vector<64x32xbf16>, vector<32x128xbf16>, vector<64x128xf32> -> vector<64x128xf32>
    %c0_5 = arith.constant 0 : index
    %c0_6 = arith.constant 0 : index
    %6 = vector.load %arg4[%c0_5, %c0_6] : memref<128x128xbf16, #tpu.memory_space<vmem>>, vector<128x128xbf16>
    %cst_7 = arith.constant dense<0.000000e+00> : vector<64x128xf32>
    %7 = tpu.matmul %3, %6, %cst_7 {dimension_numbers = #tpu.dot_dimension_numbers<[1], [0], [0], [1], [0, 0, 1, 1], [], []>} : vector<64x128xbf16>, vector<128x128xbf16>, vector<64x128xf32> -> vector<64x128xf32>
    %8 = arith.addf %5, %7 : vector<64x128xf32>
    %c0_8 = arith.constant 0 : index
    %c0_9 = arith.constant 0 : index
    %9 = vector.load %arg5[%c0_8, %c0_9] : memref<1x128xf32, #tpu.memory_space<vmem>>, vector<1x128xf32>
    %10 = vector.broadcast %9 : vector<1x128xf32> to vector<64x128xf32>
    %11 = arith.addf %8, %10 : vector<64x128xf32>
    %cst_10 = arith.constant dense<0.000000e+00> : vector<64xf32>
    %12 = vector.multi_reduction <add>, %11, %cst_10 [1] : vector<64x128xf32> to vector<64xf32>
    %13 = vector.shape_cast %12 : vector<64xf32> to vector<64x1xf32>
    %cst_11 = arith.constant 1.280000e+02 : f32
    %14 = vector.broadcast %cst_11 : f32 to vector<64x1xf32>
    %15 = arith.divf %13, %14 : vector<64x1xf32>
    %16 = vector.broadcast %15 : vector<64x1xf32> to vector<64x128xf32>
    %17 = arith.subf %11, %16 : vector<64x128xf32>
    %18 = arith.mulf %17, %17 : vector<64x128xf32>
    %cst_12 = arith.constant dense<0.000000e+00> : vector<64xf32>
    %19 = vector.multi_reduction <add>, %18, %cst_12 [1] : vector<64x128xf32> to vector<64xf32>
    %20 = vector.shape_cast %19 : vector<64xf32> to vector<64x1xf32>
    %cst_13 = arith.constant 1.280000e+02 : f32
    %21 = vector.broadcast %cst_13 : f32 to vector<64x1xf32>
    %22 = arith.divf %20, %21 : vector<64x1xf32>
    %cst_14 = arith.constant 9.99999974E-6 : f32
    %23 = vector.broadcast %cst_14 : f32 to vector<64x1xf32>
    %24 = arith.addf %22, %23 : vector<64x1xf32>
    %25 = math.rsqrt %24 : vector<64x1xf32>
    %26 = vector.broadcast %25 : vector<64x1xf32> to vector<64x128xf32>
    %27 = arith.mulf %17, %26 : vector<64x128xf32>
    %28 = arith.truncf %27 : vector<64x128xf32> to vector<64x128xbf16>
    %c0_15 = arith.constant 0 : index
    %c0_16 = arith.constant 0 : index
    %29 = vector.load %arg6[%c0_15, %c0_16] : memref<128x128xbf16, #tpu.memory_space<vmem>>, vector<128x128xbf16>
    %cst_17 = arith.constant dense<0.000000e+00> : vector<64x128xf32>
    %30 = tpu.matmul %28, %29, %cst_17 {dimension_numbers = #tpu.dot_dimension_numbers<[1], [0], [0], [1], [0, 0, 1, 1], [], []>} : vector<64x128xbf16>, vector<128x128xbf16>, vector<64x128xf32> -> vector<64x128xf32>
    %c0_18 = arith.constant 0 : index
    %c0_19 = arith.constant 0 : index
    %31 = vector.load %arg7[%c0_18, %c0_19] : memref<1x128xf32, #tpu.memory_space<vmem>>, vector<1x128xf32>
    %32 = vector.broadcast %31 : vector<1x128xf32> to vector<64x128xf32>
    %33 = arith.addf %30, %32 : vector<64x128xf32>
    %c0_20 = arith.constant 0 : index
    %c0_21 = arith.constant 0 : index
    %34 = vector.load %arg8[%c0_20, %c0_21] : memref<64x128xf32, #tpu.memory_space<vmem>>, vector<64x128xf32>
    tpu.vector_store %arg8[%c0_20, %c0_21], %33 {strides = array<i32>} : memref<64x128xf32, #tpu.memory_space<vmem>>, vector<64x128xf32>,
    return
  }
  func.func @transform_0(%arg0: i32) -> (i32, i32) {
    %c0_i32 = arith.constant 0 : i32
    %c0_i32_0 = arith.constant 0 : i32
    return %arg0, %c0_i32 : i32, i32
  }
  func.func @transform_1(%arg0: i32) -> (i32, i32) {
    %c0_i32 = arith.constant 0 : i32
    %c0_i32_0 = arith.constant 0 : i32
    return %arg0, %c0_i32 : i32, i32
  }
  func.func @transform_2(%arg0: i32) -> (i32, i32) {
    %c0_i32 = arith.constant 0 : i32
    %c0_i32_0 = arith.constant 0 : i32
    %c0_i32_1 = arith.constant 0 : i32
    return %c0_i32, %c0_i32_0 : i32, i32
  }
  func.func @transform_3(%arg0: i32) -> (i32, i32) {
    %c0_i32 = arith.constant 0 : i32
    %c0_i32_0 = arith.constant 0 : i32
    %c0_i32_1 = arith.constant 0 : i32
    return %c0_i32, %c0_i32_0 : i32, i32
  }
  func.func @transform_4(%arg0: i32) -> (i32, i32) {
    %c0_i32 = arith.constant 0 : i32
    %c0_i32_0 = arith.constant 0 : i32
    %c0_i32_1 = arith.constant 0 : i32
    return %c0_i32, %c0_i32_0 : i32, i32
  }
  func.func @transform_5(%arg0: i32) -> (i32, i32) {
    %c0_i32 = arith.constant 0 : i32
    %c0_i32_0 = arith.constant 0 : i32
    %c0_i32_1 = arith.constant 0 : i32
    return %c0_i32, %c0_i32_0 : i32, i32
  }
  func.func @transform_6(%arg0: i32) -> (i32, i32) {
    %c0_i32 = arith.constant 0 : i32
    %c0_i32_0 = arith.constant 0 : i32
    %c0_i32_1 = arith.constant 0 : i32
    return %c0_i32, %c0_i32_0 : i32, i32
  }
  func.func @transform_7(%arg0: i32) -> (i32, i32) {
    %c0_i32 = arith.constant 0 : i32
    %c0_i32_0 = arith.constant 0 : i32
    return %arg0, %c0_i32 : i32, i32
  }
}

module attributes {stable_mosaic.version = 11 : i64} {
  func.func @llm_summary_kernel(%arg0: i32, %arg1: memref<64x32xf32, #tpu.memory_space<vmem>>, %arg2: memref<64x128xf32, #tpu.memory_space<vmem>>, %arg3: memref<32x128xbf16, #tpu.memory_space<vmem>>, %arg4: memref<128x128xbf16, #tpu.memory_space<vmem>>, %arg5: memref<1x128xf32, #tpu.memory_space<vmem>>, %arg6: memref<128x128xbf16, #tpu.memory_space<vmem>>, %arg7: memref<1x128xf32, #tpu.memory_space<vmem>>, %arg8: memref<64x128xf32, #tpu.memory_space<vmem>>) attributes {dimension_semantics = [#tpu.dimension_semantics<parallel>], iteration_bounds = array<i64: 4>, scalar_prefetch = 0 : i64, scratch_operands = 0 : i64, tpu.core_type = #tpu.core_type<tc>, window_params = [{transform_indices = @transform_0, window_bounds = array<i64: 64, 32>}, {transform_indices = @transform_1, window_bounds = array<i64: 64, 128>}, {pipeline_mode = #tpu.pipeline_mode<synchronous>, transform_indices = @transform_2, window_bounds = array<i64: 32, 128>}, {pipeline_mode = #tpu.pipeline_mode<synchronous>, transform_indices = @transform_3, window_bounds = array<i64: 128, 128>}, {pipeline_mode = #tpu.pipeline_mode<synchronous>, transform_indices = @transform_4, window_bounds = array<i64: 1, 128>}, {pipeline_mode = #tpu.pipeline_mode<synchronous>, transform_indices = @transform_5, window_bounds = array<i64: 128, 128>}, {pipeline_mode = #tpu.pipeline_mode<synchronous>, transform_indices = @transform_6, window_bounds = array<i64: 1, 128>}, {transform_indices = @transform_7, window_bounds = array<i64: 64, 128>}]} {
    %c0 = arith.constant 0 : index
    %c0_0 = arith.constant 0 : index
    %0 = vector.load %arg1[%c0, %c0_0] : memref<64x32xf32, #tpu.memory_space<vmem>>, vector<64x32xf32>
    %1 = arith.truncf %0 : vector<64x32xf32> to vector<64x32xbf16>
    %c0_1 = arith.constant 0 : index
    %c0_2 = arith.constant 0 : index
    %2 = vector.load %arg2[%c0_1, %c0_2] : memref<64x128xf32, #tpu.memory_space<vmem>>, vector<64x128xf32>
    %3 = arith.truncf %2 : vector<64x128xf32> to vector<64x128xbf16>
    %c0_3 = arith.constant 0 : index
    %c0_4 = arith.constant 0 : index
    %4 = vector.load %arg3[%c0_3, %c0_4] : memref<32x128xbf16, #tpu.memory_space<vmem>>, vector<32x128xbf16>
    %cst = arith.constant dense<0.000000e+00> : vector<64x128xf32>
    %5 = tpu.matmul %1, %4, %cst {dimension_numbers = #tpu.dot_dimension_numbers<[1], [0], [0], [1], [0, 0, 1, 1], [], []>} : vector<64x32xbf16>, vector<32x128xbf16>, vector<64x128xf32> -> vector<64x128xf32>
    %c0_5 = arith.constant 0 : index
    %c0_6 = arith.constant 0 : index
    %6 = vector.load %arg4[%c0_5, %c0_6] : memref<128x128xbf16, #tpu.memory_space<vmem>>, vector<128x128xbf16>
    %cst_7 = arith.constant dense<0.000000e+00> : vector<64x128xf32>
    %7 = tpu.matmul %3, %6, %cst_7 {dimension_numbers = #tpu.dot_dimension_numbers<[1], [0], [0], [1], [0, 0, 1, 1], [], []>} : vector<64x128xbf16>, vector<128x128xbf16>, vector<64x128xf32> -> vector<64x128xf32>
    %8 = arith.addf %5, %7 : vector<64x128xf32>
    %c0_8 = arith.constant 0 : index
    %c0_9 = arith.constant 0 : index
    %9 = vector.load %arg5[%c0_8, %c0_9] : memref<1x128xf32, #tpu.memory_space<vmem>>, vector<1x128xf32>
    %10 = vector.broadcast %9 : vector<1x128xf32> to vector<64x128xf32>
    %11 = arith.addf %8, %10 : vector<64x128xf32>
    %cst_10 = arith.constant dense<0.000000e+00> : vector<64xf32>
    %12 = vector.multi_reduction <add>, %11, %cst_10 [1] : vector<64x128xf32> to vector<64xf32>
    %13 = vector.shape_cast %12 : vector<64xf32> to vector<64x1xf32>
    %cst_11 = arith.constant 1.280000e+02 : f32
    %14 = vector.broadcast %cst_11 : f32 to vector<64x1xf32>
    %15 = arith.divf %13, %14 : vector<64x1xf32>
    %16 = vector.broadcast %15 : vector<64x1xf32> to vector<64x128xf32>
    %17 = arith.subf %11, %16 : vector<64x128xf32>
    %18 = arith.mulf %17, %17 : vector<64x128xf32>
    %cst_12 = arith.constant dense<0.000000e+00> : vector<64xf32>
    %19 = vector.multi_reduction <add>, %18, %cst_12 [1] : vector<64x128xf32> to vector<64xf32>
    %20 = vector.shape_cast %19 : vector<64xf32> to vector<64x1xf32>
    %cst_13 = arith.constant 1.280000e+02 : f32
    %21 = vector.broadcast %cst_13 : f32 to vector<64x1xf32>
    %22 = arith.divf %20, %21 : vector<64x1xf32>
    %cst_14 = arith.constant 9.99999974E-6 : f32
    %23 = vector.broadcast %cst_14 : f32 to vector<64x1xf32>
    %24 = arith.addf %22, %23 : vector<64x1xf32>
    %25 = math.rsqrt %24 : vector<64x1xf32>
    %26 = vector.broadcast %25 : vector<64x1xf32> to vector<64x128xf32>
    %27 = arith.mulf %17, %26 : vector<64x128xf32>
    %28 = arith.truncf %27 : vector<64x128xf32> to vector<64x128xbf16>
    %c0_15 = arith.constant 0 : index
    %c0_16 = arith.constant 0 : index
    %29 = vector.load %arg6[%c0_15, %c0_16] : memref<128x128xbf16, #tpu.memory_space<vmem>>, vector<128x128xbf16>
    %cst_17 = arith.constant dense<0.000000e+00> : vector<64x128xf32>
    %30 = tpu.matmul %28, %29, %cst_17 {dimension_numbers = #tpu.dot_dimension_numbers<[1], [0], [0], [1], [0, 0, 1, 1], [], []>} : vector<64x128xbf16>, vector<128x128xbf16>, vector<64x128xf32> -> vector<64x128xf32>
    %c0_18 = arith.constant 0 : index
    %c0_19 = arith.constant 0 : index
    %31 = vector.load %arg7[%c0_18, %c0_19] : memref<1x128xf32, #tpu.memory_space<vmem>>, vector<1x128xf32>
    %32 = vector.broadcast %31 : vector<1x128xf32> to vector<64x128xf32>
    %33 = arith.addf %30, %32 : vector<64x128xf32>
    %c0_20 = arith.constant 0 : index
    %c0_21 = arith.constant 0 : index
    %34 = vector.load %arg8[%c0_20, %c0_21] : memref<64x128xf32, #tpu.memory_space<vmem>>, vector<64x128xf32>
    tpu.vector_store %arg8[%c0_20, %c0_21], %33 {strides = array<i32>} : memref<64x128xf32, #tpu.memory_space<vmem>>, vector<64x128xf32>,
    return
  }
  func.func @transform_0(%arg0: i32) -> (i32, i32) {
    %c0_i32 = arith.constant 0 : i32
    %c0_i32_0 = arith.constant 0 : i32
    return %arg0, %c0_i32 : i32, i32
  }
  func.func @transform_1(%arg0: i32) -> (i32, i32) {
    %c0_i32 = arith.constant 0 : i32
    %c0_i32_0 = arith.constant 0 : i32
    return %arg0, %c0_i32 : i32, i32
  }
  func.func @transform_2(%arg0: i32) -> (i32, i32) {
    %c0_i32 = arith.constant 0 : i32
    %c0_i32_0 = arith.constant 0 : i32
    %c0_i32_1 = arith.constant 0 : i32
    return %c0_i32, %c0_i32_0 : i32, i32
  }
  func.func @transform_3(%arg0: i32) -> (i32, i32) {
    %c0_i32 = arith.constant 0 : i32
    %c0_i32_0 = arith.constant 0 : i32
    %c0_i32_1 = arith.constant 0 : i32
    return %c0_i32, %c0_i32_0 : i32, i32
  }
  func.func @transform_4(%arg0: i32) -> (i32, i32) {
    %c0_i32 = arith.constant 0 : i32
    %c0_i32_0 = arith.constant 0 : i32
    %c0_i32_1 = arith.constant 0 : i32
    return %c0_i32, %c0_i32_0 : i32, i32
  }
  func.func @transform_5(%arg0: i32) -> (i32, i32) {
    %c0_i32 = arith.constant 0 : i32
    %c0_i32_0 = arith.constant 0 : i32
    %c0_i32_1 = arith.constant 0 : i32
    return %c0_i32, %c0_i32_0 : i32, i32
  }
  func.func @transform_6(%arg0: i32) -> (i32, i32) {
    %c0_i32 = arith.constant 0 : i32
    %c0_i32_0 = arith.constant 0 : i32
    %c0_i32_1 = arith.constant 0 : i32
    return %c0_i32, %c0_i32_0 : i32, i32
  }
  func.func @transform_7(%arg0: i32) -> (i32, i32) {
    %c0_i32 = arith.constant 0 : i32
    %c0_i32_0 = arith.constant 0 : i32
    return %arg0, %c0_i32 : i32, i32
  }
}

</mosaic_0001>

<llo_original>
// kernel: tpu_custom_call.1
$region0: #{tpu_custom_call.1}
  #allocation0 [shape = 'u32[]', space=smem, size = 0x4, offset = 0x4, fixed_abs, tag = 'smem constant byte address 0x4 - core index']
  #allocation1 [shape = 'u32[144,128]{1,0:T(1,128)}', space=vmem, size = 0x12000, scoped, tag = 'internal scratch']
  %s0 = inlined_call_operand.vmem [shape: f32[256,32], index: 0, kind: input, shape index: {}]
  %s1 = inlined_call_operand.vmem [shape: f32[256,128], index: 1, kind: input, shape index: {}]
  %s2 = inlined_call_operand.hbm [shape: bf16[32,128], index: 2, kind: input, shape index: {}]
  %s3 = inlined_call_operand.vmem [shape: bf16[128,128], index: 3, kind: input, shape index: {}]
  %s4 = inlined_call_operand.vmem [shape: f32[1,128], index: 4, kind: input, shape index: {}]
  %s5 = inlined_call_operand.hbm [shape: bf16[128,128], index: 5, kind: input, shape index: {}]
  %s6 = inlined_call_operand.vmem [shape: f32[1,128], index: 6, kind: input, shape index: {}]
  %s7 = inlined_call_operand.hbm [shape: f32[256,128], index: 7, kind: output, shape index: {}]
  %s8 = sld [smem:[#allocation0]]
  $region69: #{tpu_custom_call.1} parent=0
    _
  %s10 = ssub.s32 1, %s8
  %s11 = scalar_select 0, %s10, %s8
  $region1: #{tpu_custom_call.1} parent=0
    #allocation2 [shape = 'u8[8192]{0}', space=vmem, size = 0x2000, scoped, tag = 'input window, operand 2, single buffered']
    #allocation3 [shape = 's32[2]{0}', space=sflag, size = 0x8, scoped, tag = 'scoped memory for tpu_custom_call.1']
    #allocation4 [shape = 's32[2]{0}', space=sflag, size = 0x8, scoped, tag = 'scoped memory for tpu_custom_call.1']
    #allocation5 [shape = 'u8[32768]{0}', space=vmem, size = 0x8000, scoped, tag = 'input window, operand 5, single buffered']
    #allocation6 [shape = 's32[1]{0}', space=sflag, size = 0x4, scoped, tag = 'scoped memory for tpu_custom_call.1']
    #allocation7 [shape = 'u8[65536]{0}', space=vmem, size = 0x10000, scoped, tag = 'output window, operand 0']
    %12 = vsyncpa [#allocation3], 0
    %13 = vsyncpa [#allocation6], 0
    %14 = vsyncpa [#allocation4], 0
    %s15 = scalar_lea.sflag [#allocation4], 1
    %16 = vsyncpa %s15, 0
    loop: start=0, step=1, limit=6
    $region2: #{tpu_custom_call.1} parent=1 // loop_pre_header
      _
    $region3: #{tpu_custom_call.1} parent=1 // loop_header
      %s18 = sphi 0, %s22
      %p19 = scmp.ge.s32.totalorder %s18, 6
      %s28 = sphi 0, %s30
      %s31 = sphi 0, %s28
      %s32 = sphi 0, %s31
      %s48 = sphi 0, %s32
      %s54 = sphi 0, %s56
      %s57 = sphi 0, %s54
      %s58 = sphi 0, %s57
      %s74 = sphi 0, %s58
      %s78 = sphi 0, %s78
      %s80 = sphi 0, %s78
      %s81 = sphi 0, %s80
      %s95 = sphi 0, %s81
      %s99 = sphi 0, %s99
      %s101 = sphi 0, %s99
      %s102 = sphi 0, %s101
      %s116 = sphi 0, %s102
      %s120 = sphi 0, %s120
      %s122 = sphi 0, %s120
      %s123 = sphi 0, %s122
      %s137 = sphi 0, %s123
      %s141 = sphi 0, %s141
      %s143 = sphi 0, %s141
      %s144 = sphi 0, %s143
      %s158 = sphi 0, %s144
      %s162 = sphi 0, %s162
      %s164 = sphi 0, %s162
      %s165 = sphi 0, %s164
      %s179 = sphi 0, %s165
      %s185 = sphi 0, %s187
      %s188 = sphi 0, %s185
      %s189 = sphi 0, %s188
      %s205 = sphi 0, %s189
    $region4: #{tpu_custom_call.1} parent=1 // loop_header_branch
      %21 = sbr.rel (%p19) target = $region8
    $region5: #{tpu_custom_call.1} parent=1 // loop_body
      %s23 = ssub.s32 %s18, 1
      %s24 = ssub.s32 %s18, 2
      %s25 = sadd.s32 %s18, 1
      %s26 = ssub.s32 %s18, %s25
      %p27 = scmp.eq.s32.totalorder %s26, 0
      %s29 = sadd.s32 %s28, 1
      %s30 = scalar_select %p27, %s28, %s29
      %p33 = pneg %p27
      %p34 = scmp.eq.s32.totalorder %s18, 3
      %p35 = por %p33, %p34
      %p36 = scmp.ne.s32.totalorder %s28, %s31
      %p37 = scmp.eq.s32.totalorder %s18, 0
      %p38 = por %p36, %p37
      %p39 = scmp.ne.s32.totalorder %s28, %s31
      %p40 = scmp.eq.s32.totalorder %s23, 3
      %p41 = por %p39, %p40
      %p42 = scmp.ne.s32.totalorder %s31, %s32
      %p43 = scmp.eq.s32.totalorder %s23, 0
      %p44 = por %p42, %p43
      %p45 = scmp.ne.s32.totalorder %s31, %s32
      %p46 = scmp.eq.s32.totalorder %s24, 3
      %p47 = por %p45, %p46
      %p49 = scmp.ne.s32.totalorder %s32, %s48
      %p50 = scmp.eq.s32.totalorder %s24, 0
      %p51 = por %p49, %p50
      %s52 = ssub.s32 %s18, %s25
      %p53 = scmp.eq.s32.totalorder %s52, 0
      %s55 = sadd.s32 %s54, 1
      %s56 = scalar_select %p53, %s54, %s55
      %p59 = pneg %p53
      %p60 = scmp.eq.s32.totalorder %s18, 3
      %p61 = por %p59, %p60
      %p62 = scmp.ne.s32.totalorder %s54, %s57
      %p63 = scmp.eq.s32.totalorder %s18, 0
      %p64 = por %p62, %p63
      %p65 = scmp.ne.s32.totalorder %s54, %s57
      %p66 = scmp.eq.s32.totalorder %s23, 3
      %p67 = por %p65, %p66
      %p68 = scmp.ne.s32.totalorder %s57, %s58
      %p69 = scmp.eq.s32.totalorder %s23, 0
      %p70 = por %p68, %p69
      %p71 = scmp.ne.s32.totalorder %s57, %s58
      %p72 = scmp.eq.s32.totalorder %s24, 3
      %p73 = por %p71, %p72
      %p75 = scmp.ne.s32.totalorder %s58, %s74
      %p76 = scmp.eq.s32.totalorder %s24, 0
      %p77 = por %p75, %p76
      %s79 = sadd.s32 %s78, 1
      %p82 = scmp.eq.s32.totalorder %s18, 3
      %p83 = scmp.ne.s32.totalorder %s78, %s80
      %p84 = scmp.eq.s32.totalorder %s18, 0
      %p85 = por %p83, %p84
      %p86 = scmp.ne.s32.totalorder %s78, %s80
      %p87 = scmp.eq.s32.totalorder %s23, 3
      %p88 = por %p86, %p87
      %p89 = scmp.ne.s32.totalorder %s80, %s81
      %p90 = scmp.eq.s32.totalorder %s23, 0
      %p91 = por %p89, %p90
      %p92 = scmp.ne.s32.totalorder %s80, %s81
      %p93 = scmp.eq.s32.totalorder %s24, 3
      %p94 = por %p92, %p93
      %p96 = scmp.ne.s32.totalorder %s81, %s95
      %p97 = scmp.eq.s32.totalorder %s24, 0
      %p98 = por %p96, %p97
      %s100 = sadd.s32 %s99, 1
      %p103 = scmp.eq.s32.totalorder %s18, 3
      %p104 = scmp.ne.s32.totalorder %s99, %s101
      %p105 = scmp.eq.s32.totalorder %s18, 0
      %p106 = por %p104, %p105
      %p107 = scmp.ne.s32.totalorder %s99, %s101
      %p108 = scmp.eq.s32.totalorder %s23, 3
      %p109 = por %p107, %p108
      %p110 = scmp.ne.s32.totalorder %s101, %s102
      %p111 = scmp.eq.s32.totalorder %s23, 0
      %p112 = por %p110, %p111
      %p113 = scmp.ne.s32.totalorder %s101, %s102
      %p114 = scmp.eq.s32.totalorder %s24, 3
      %p115 = por %p113, %p114
      %p117 = scmp.ne.s32.totalorder %s102, %s116
      %p118 = scmp.eq.s32.totalorder %s24, 0
      %p119 = por %p117, %p118
      %s121 = sadd.s32 %s120, 1
      %p124 = scmp.eq.s32.totalorder %s18, 3
      %p125 = scmp.ne.s32.totalorder %s120, %s122
      %p126 = scmp.eq.s32.totalorder %s18, 0
      %p127 = por %p125, %p126
      %p128 = scmp.ne.s32.totalorder %s120, %s122
      %p129 = scmp.eq.s32.totalorder %s23, 3
      %p130 = por %p128, %p129
      %p131 = scmp.ne.s32.totalorder %s122, %s123
      %p132 = scmp.eq.s32.totalorder %s23, 0
      %p133 = por %p131, %p132
      %p134 = scmp.ne.s32.totalorder %s122, %s123
      %p135 = scmp.eq.s32.totalorder %s24, 3
      %p136 = por %p134, %p135
      %p138 = scmp.ne.s32.totalorder %s123, %s137
      %p139 = scmp.eq.s32.totalorder %s24, 0
      %p140 = por %p138, %p139
      %s142 = sadd.s32 %s141, 1
      %p145 = scmp.eq.s32.totalorder %s18, 3
      %p146 = scmp.ne.s32.totalorder %s141, %s143
      %p147 = scmp.eq.s32.totalorder %s18, 0
      %p148 = por %p146, %p147
      %p149 = scmp.ne.s32.totalorder %s141, %s143
      %p150 = scmp.eq.s32.totalorder %s23, 3
      %p151 = por %p149, %p150
      %p152 = scmp.ne.s32.totalorder %s143, %s144
      %p153 = scmp.eq.s32.totalorder %s23, 0
      %p154 = por %p152, %p153
      %p155 = scmp.ne.s32.totalorder %s143, %s144
      %p156 = scmp.eq.s32.totalorder %s24, 3
      %p157 = por %p155, %p156
      %p159 = scmp.ne.s32.totalorder %s144, %s158
      %p160 = scmp.eq.s32.totalorder %s24, 0
      %p161 = por %p159, %p160
      %s163 = sadd.s32 %s162, 1
      %p166 = scmp.eq.s32.totalorder %s18, 3
      %p167 = scmp.ne.s32.totalorder %s162, %s164
      %p168 = scmp.eq.s32.totalorder %s18, 0
      %p169 = por %p167, %p168
      %p170 = scmp.ne.s32.totalorder %s162, %s164
      %p171 = scmp.eq.s32.totalorder %s23, 3
      %p172 = por %p170, %p171
      %p173 = scmp.ne.s32.totalorder %s164, %s165
      %p174 = scmp.eq.s32.totalorder %s23, 0
      %p175 = por %p173, %p174
      %p176 = scmp.ne.s32.totalorder %s164, %s165
      %p177 = scmp.eq.s32.totalorder %s24, 3
      %p178 = por %p176, %p177
      %p180 = scmp.ne.s32.totalorder %s165, %s179
      %p181 = scmp.eq.s32.totalorder %s24, 0
      %p182 = por %p180, %p181
      %s183 = ssub.s32 %s18, %s25
      %p184 = scmp.eq.s32.totalorder %s183, 0
      %s186 = sadd.s32 %s185, 1
      %s187 = scalar_select %p184, %s185, %s186
      %p190 = pneg %p184
      %p191 = scmp.eq.s32.totalorder %s18, 3
      %p192 = por %p190, %p191
      %p193 = scmp.ne.s32.totalorder %s185, %s188
      %p194 = scmp.eq.s32.totalorder %s18, 0
      %p195 = por %p193, %p194
      %p196 = scmp.ne.s32.totalorder %s185, %s188
      %p197 = scmp.eq.s32.totalorder %s23, 3
      %p198 = por %p196, %p197
      %p199 = scmp.ne.s32.totalorder %s188, %s189
      %p200 = scmp.eq.s32.totalorder %s23, 0
      %p201 = por %p199, %p200
      %p202 = scmp.ne.s32.totalorder %s188, %s189
      %p203 = scmp.eq.s32.totalorder %s24, 3
      %p204 = por %p202, %p203
      %p206 = scmp.ne.s32.totalorder %s189, %s205
      %p207 = scmp.eq.s32.totalorder %s24, 0
      %p208 = por %p206, %p207
      %p209 = scmp.le.s32.totalorder 1, %s18
      %p210 = scmp.lt.s32.totalorder %s18, 5
      %p211 = pnand %p209, %p210
      %p212 = pneg %p211
      // Predicated region
      $region9: #{tpu_custom_call.1} parent=5 // pred_check
        _
      $region10: #{tpu_custom_call.1} parent=5 // pred_check_branch
        %214 = sbr.rel (%p211) target = $region12
      $region11: #{tpu_custom_call.1} parent=5 // pred_region
        %s215 = ssub.s32 %s18, 1
        // Predicated region
        $region13: #{tpu_custom_call.1} parent=11 // pred_check
          %p216 = pneg %p91
        $region14: #{tpu_custom_call.1} parent=11 // pred_check_branch
          %218 = sbr.rel (%p216) target = $region16
        $region15: #{tpu_custom_call.1} parent=11 // pred_region
          %s220 = ssub.s32 256, 256
          %221 = vsyncadd [#allocation3], %s220
          %s222 = sshll.u32 [#allocation2], 4
          %s223 = int_to_ptr.vmem [resolvable:$true] %s222
          %228 = dma.hbm_to_vmem [thread:$0]  %s2, 256, %s223, [#allocation3], 64, 64, 4
        $region16: #{tpu_custom_call.1} parent=11 // pred_fallthru
          _
        // Predicated region
        $region17: #{tpu_custom_call.1} parent=11 // pred_check
          %p229 = pneg %p112
        $region18: #{tpu_custom_call.1} parent=11 // pred_check_branch
          %231 = sbr.rel (%p229) target = $region20
        $region19: #{tpu_custom_call.1} parent=11 // pred_region
          _
        $region20: #{tpu_custom_call.1} parent=11 // pred_fallthru
          _
        // Predicated region
        $region21: #{tpu_custom_call.1} parent=11 // pred_check
          %p232 = pneg %p133
        $region22: #{tpu_custom_call.1} parent=11 // pred_check_branch
          %234 = sbr.rel (%p232) target = $region24
        $region23: #{tpu_custom_call.1} parent=11 // pred_region
          _
        $region24: #{tpu_custom_call.1} parent=11 // pred_fallthru
          _
        // Predicated region
        $region25: #{tpu_custom_call.1} parent=11 // pred_check
          %p235 = pneg %p154
        $region26: #{tpu_custom_call.1} parent=11 // pred_check_branch
          %237 = sbr.rel (%p235) target = $region28
        $region27: #{tpu_custom_call.1} parent=11 // pred_region
          %s239 = ssub.s32 1024, 1024
          %240 = vsyncadd [#allocation6], %s239
          %s241 = sshll.u32 [#allocation5], 4
          %s242 = int_to_ptr.vmem [resolvable:$true] %s241
          %247 = dma.hbm_to_vmem [thread:$0]  %s5, 1024, %s242, [#allocation6], 64, 64, 4
        $region28: #{tpu_custom_call.1} parent=11 // pred_fallthru
          _
        // Predicated region
        $region29: #{tpu_custom_call.1} parent=11 // pred_check
          %p248 = pneg %p175
        $region30: #{tpu_custom_call.1} parent=11 // pred_check_branch
          %250 = sbr.rel (%p248) target = $region32
        $region31: #{tpu_custom_call.1} parent=11 // pred_region
          _
        $region32: #{tpu_custom_call.1} parent=11 // pred_fallthru
          _
      $region12: #{tpu_custom_call.1} parent=5 // pred_fallthru
        _
      %p251 = scmp.lt.s32.totalorder %s18, 4
      // Predicated region
      $region33: #{tpu_custom_call.1} parent=5 // pred_check
        %p252 = pneg %p251
      $region34: #{tpu_custom_call.1} parent=5 // pred_check_branch
        %254 = sbr.rel (%p252) target = $region36
      $region35: #{tpu_custom_call.1} parent=5 // pred_region
        // Predicated region
        $region37: #{tpu_custom_call.1} parent=35 // pred_check
          %p255 = pneg %p38
        $region38: #{tpu_custom_call.1} parent=35 // pred_check_branch
          %257 = sbr.rel (%p255) target = $region40
        $region39: #{tpu_custom_call.1} parent=35 // pred_region
          %s258 = smul.u32 8, %s18
          %p259 = scmp.lt.s32.totalorder %s258, 31
          %s260 = scalar_select %p259, %s258, 31
          %s261 = smul.addr %s260, 8
          %s262 = scalar_lea.vmem %s0, %s261
          %s263 = smul.u32 8, %s18
        $region40: #{tpu_custom_call.1} parent=35 // pred_fallthru
          _
        // Predicated region
        $region41: #{tpu_custom_call.1} parent=35 // pred_check
          %p264 = pneg %p64
        $region42: #{tpu_custom_call.1} parent=35 // pred_check_branch
          %266 = sbr.rel (%p264) target = $region44
        $region43: #{tpu_custom_call.1} parent=35 // pred_region
          %s267 = smul.u32 8, %s18
          %p268 = scmp.lt.s32.totalorder %s267, 31
          %s269 = scalar_select %p268, %s267, 31
          %s270 = smul.addr %s269, 8
          %s271 = scalar_lea.vmem %s1, %s270
          %s272 = smul.u32 8, %s18
        $region44: #{tpu_custom_call.1} parent=35 // pred_fallthru
          _
      $region36: #{tpu_custom_call.1} parent=5 // pred_fallthru
        _
      %p273 = scmp.le.s32.totalorder 1, %s18
      %p274 = scmp.lt.s32.totalorder %s18, 5
      %p275 = pnand %p273, %p274
      %p276 = pneg %p275
      // Predicated region
      $region45: #{tpu_custom_call.1} parent=5 // pred_check
        _
      $region46: #{tpu_custom_call.1} parent=5 // pred_check_branch
        %278 = sbr.rel (%p275) target = $region48
      $region47: #{tpu_custom_call.1} parent=5 // pred_region
        %s279 = ssub.s32 %s18, 1
        // Predicated region
        $region49: #{tpu_custom_call.1} parent=47 // pred_check
          %p280 = pneg %p91
        $region50: #{tpu_custom_call.1} parent=47 // pred_check_branch
          %282 = sbr.rel (%p280) target = $region52
        $region51: #{tpu_custom_call.1} parent=47 // pred_region
          %283 = dma.done [#allocation3], 256
        $region52: #{tpu_custom_call.1} parent=47 // pred_fallthru
          _
        // Predicated region
        $region53: #{tpu_custom_call.1} parent=47 // pred_check
          %p284 = pneg %p154
        $region54: #{tpu_custom_call.1} parent=47 // pred_check_branch
          %286 = sbr.rel (%p284) target = $region56
        $region55: #{tpu_custom_call.1} parent=47 // pred_region
          %287 = dma.done [#allocation6], 1024
        $region56: #{tpu_custom_call.1} parent=47 // pred_fallthru
          _
        %s288 = smul.u32 8, %s23
        %p289 = scmp.lt.s32.totalorder %s288, 31
        %s290 = scalar_select %p289, %s288, 31
        %s291 = smul.addr %s290, 8
        %s292 = scalar_lea.vmem %s0, %s291
        %p293 = pneg %p44
        %p294 = pneg %p41
        %s295 = smul.u32 8, %s23
        %p296 = scmp.lt.s32.totalorder %s295, 31
        %s297 = scalar_select %p296, %s295, 31
        %s298 = smul.addr %s297, 8
        %s299 = scalar_lea.vmem %s1, %s298
        %p300 = pneg %p70
        %p301 = pneg %p67
        %p302 = pneg %p91
        %p303 = pneg %p88
        %p304 = pneg %p112
        %p305 = pneg %p109
        %p306 = pneg %p133
        %p307 = pneg %p130
        %p308 = pneg %p154
        %p309 = pneg %p151
        %p310 = pneg %p175
        %p311 = pneg %p172
        %p312 = pneg %p201
        %p313 = pneg %p198
        %s314 = sand.u32 %s188, 1
        %s315 = scalar_lea.sflag [#allocation4], %s314
        %s316 = sand.u32 %s188, 1
        %s317 = smul.addr %s316, 64
        %s318 = scalar_lea.vmem [#allocation7], %s317
        %s319 = smul.u32 8, %s23
        %p320 = scmp.lt.s32.totalorder %s319, 31
        %s321 = scalar_select %p320, %s319, 31
        %s322 = smul.addr %s321, 8
        %s323 = scalar_lea.vmem %s0, %s322
        %s324 = smul.u32 8, %s23
        %s325 = smul.u32 8, %s23
        %p326 = scmp.lt.s32.totalorder %s325, 31
        %s327 = scalar_select %p326, %s325, 31
        %s328 = smul.addr %s327, 8
        %s329 = scalar_lea.vmem %s1, %s328
        %s330 = smul.u32 8, %s23
        %s331 = smul.u32 8, %s23
        %v333 = vld [vmem:[%s323] sm:$0xff]
        %v334 = vld [vmem:[%s323 + $0x8] sm:$0xff]
        %v335 = vld [vmem:[%s323 + $0x10] sm:$0xff]
        %v336 = vld [vmem:[%s323 + $0x18] sm:$0xff]
        %v337 = vld [vmem:[%s323 + $0x20] sm:$0xff]
        %v338 = vld [vmem:[%s323 + $0x28] sm:$0xff]
        %v339 = vld [vmem:[%s323 + $0x30] sm:$0xff]
        %v340 = vld [vmem:[%s323 + $0x38] sm:$0xff]
        %v341 = vpack.c.bf16 %v334, %v333
        %v342 = vpack.c.bf16 %v336, %v335
        %v343 = vpack.c.bf16 %v338, %v337
        %v344 = vpack.c.bf16 %v340, %v339
        %v345 = vld [vmem:[%s329] sm:$0xff]
        %v346 = vld [vmem:[%s329 + $0x8] sm:$0xff]
        %v347 = vld [vmem:[%s329 + $0x10] sm:$0xff]
        %v348 = vld [vmem:[%s329 + $0x18] sm:$0xff]
        %v349 = vld [vmem:[%s329 + $0x20] sm:$0xff]
        %v350 = vld [vmem:[%s329 + $0x28] sm:$0xff]
        %v351 = vld [vmem:[%s329 + $0x30] sm:$0xff]
        %v352 = vld [vmem:[%s329 + $0x38] sm:$0xff]
        %v353 = vpack.c.bf16 %v346, %v345
        %v354 = vpack.c.bf16 %v348, %v347
        %v355 = vpack.c.bf16 %v350, %v349
        %v356 = vpack.c.bf16 %v352, %v351
        %v357 = vld [vmem:[#allocation2] sm:$0xf]
        %v358 = vld [vmem:[#allocation2 + $0x4] sm:$0xf]
        %v359 = vld [vmem:[#allocation2 + $0x8] sm:$0xf]
        %v360 = vld [vmem:[#allocation2 + $0xc] sm:$0xf]
        %v361 = vld [vmem:[%s3] sm:$0xf]
        %v362 = vld [vmem:[%s3 + $0x4] sm:$0xf]
        %v363 = vld [vmem:[%s3 + $0x8] sm:$0xf]
        %v364 = vld [vmem:[%s3 + $0xc] sm:$0xf]
        %v365 = vld [vmem:[%s3 + $0x10] sm:$0xf]
        %v366 = vld [vmem:[%s3 + $0x14] sm:$0xf]
        %v367 = vld [vmem:[%s3 + $0x18] sm:$0xf]
        %v368 = vld [vmem:[%s3 + $0x1c] sm:$0xf]
        %v369 = vld [vmem:[%s3 + $0x20] sm:$0xf]
        %v370 = vld [vmem:[%s3 + $0x24] sm:$0xf]
        %v371 = vld [vmem:[%s3 + $0x28] sm:$0xf]
        %v372 = vld [vmem:[%s3 + $0x2c] sm:$0xf]
        %v373 = vld [vmem:[%s3 + $0x30] sm:$0xf]
        %v374 = vld [vmem:[%s3 + $0x34] sm:$0xf]
        %v375 = vld [vmem:[%s3 + $0x38] sm:$0xf]
        %v376 = vld [vmem:[%s3 + $0x3c] sm:$0xf]
        %v393 = vunpack.c.l.b16 %v361
        %v394 = vunpack.c.l.b16 %v362
        %v395 = vunpack.c.l.b16 %v363
        %v396 = vunpack.c.l.b16 %v364
        %v397 = vunpack.c.l.b16 %v365
        %v398 = vunpack.c.l.b16 %v366
        %v399 = vunpack.c.l.b16 %v367
        %v400 = vunpack.c.l.b16 %v368
        %v401 = vunpack.c.l.b16 %v369
        %v402 = vunpack.c.l.b16 %v370
        %v403 = vunpack.c.l.b16 %v371
        %v404 = vunpack.c.l.b16 %v372
        %v405 = vunpack.c.l.b16 %v373
        %v406 = vunpack.c.l.b16 %v374
        %v407 = vunpack.c.l.b16 %v375
        %v408 = vunpack.c.l.b16 %v376
        %v409 = vpack.c.b16 %v394, %v393
        %v410 = vpack.c.b16 %v396, %v395
        %v411 = vpack.c.b16 %v398, %v397
        %v412 = vpack.c.b16 %v400, %v399
        %v413 = vpack.c.b16 %v402, %v401
        %v414 = vpack.c.b16 %v404, %v403
        %v415 = vpack.c.b16 %v406, %v405
        %v416 = vpack.c.b16 %v408, %v407
        %425 = vmatprep.subr.bf16.mxu0 0
        %426 = vmatpush1.bf16.msra.mxu0 %v416
        %427 = vmatprep.subr.bf16.mxu0 0
        %428 = vmatpush1.bf16.msra.mxu0 %v415
        %429 = vmatprep.subr.bf16.mxu0 0
        %430 = vmatpush1.bf16.msra.mxu0 %v414
        %431 = vmatprep.subr.bf16.mxu0 0
        %432 = vmatpush1.bf16.msra.mxu0 %v413
        %433 = vmatprep.subr.bf16.mxu0 0
        %434 = vmatpush1.bf16.msra.mxu0 %v412
        %435 = vmatprep.subr.bf16.mxu0 0
        %436 = vmatpush1.bf16.msra.mxu0 %v411
        %437 = vmatprep.subr.bf16.mxu0 0
        %438 = vmatpush1.bf16.msra.mxu0 %v410
        %439 = vmatprep.subr.bf16.mxu0 0
        %440 = vmatpush1.bf16.msra.mxu0 %v409
        %441 = vmatprep.subr.bf16.mxu0 0
        %442 = vmatpush2.bf16.msra.mxu0 0
        %443 = vmatprep.subr.bf16.mxu0 0
        %444 = vmatpush2.bf16.msra.mxu0 0
        %445 = vmatprep.subr.bf16.mxu0 0
        %446 = vmatpush2.bf16.msra.mxu0 0
        %447 = vmatprep.subr.bf16.mxu0 0
        %448 = vmatpush2.bf16.msra.mxu0 0
        %449 = vmatprep.subr.bf16.mxu0 0
        %450 = vmatpush2.bf16.msra.mxu0 0
        %451 = vmatprep.subr.bf16.mxu0 0
        %452 = vmatpush2.bf16.msra.mxu0 0
        %453 = vmatprep.subr.bf16.mxu0 0
        %454 = vmatpush2.bf16.msra.mxu0 0
        %455 = vmatprep.subr.bf16.mxu0 0
        %456 = vmatpush2.bf16.msra.mxu0 0
        %457 = vmatprep.mubr.bf16.mxu0 0
        %458 = vmatmul.mubr.bf16.gmra.mxu0 %v353
        %v459 = vpop.f32.mrf.mxu0
        %v460 = vadd.f32 0.0, %v459
        %v461 = vpop.f32.mrf.mxu0
        %v462 = vpop.f32.mrf.mxu0
        %v463 = vadd.f32 0.0, %v462
        %v464 = vpop.f32.mrf.mxu0
        %465 = vmatprep.mubr.bf16.mxu0 0
        %466 = vmatmul.mubr.bf16.gmra.mxu0 %v354
        %v467 = vpop.f32.mrf.mxu0
        %v468 = vadd.f32 0.0, %v467
        %v469 = vpop.f32.mrf.mxu0
        %v470 = vpop.f32.mrf.mxu0
        %v471 = vadd.f32 0.0, %v470
        %v472 = vpop.f32.mrf.mxu0
        %473 = vmatprep.mubr.bf16.mxu0 0
        %474 = vmatmul.mubr.bf16.gmra.mxu0 %v355
        %v475 = vpop.f32.mrf.mxu0
        %v476 = vadd.f32 0.0, %v475
        %v477 = vpop.f32.mrf.mxu0
        %v478 = vpop.f32.mrf.mxu0
        %v479 = vadd.f32 0.0, %v478
        %v480 = vpop.f32.mrf.mxu0
        %481 = vmatprep.mubr.bf16.mxu0 0
        %482 = vmatmul.mubr.bf16.gmra.mxu0 %v356
        %v483 = vpop.f32.mrf.mxu0
        %v484 = vadd.f32 0.0, %v483
        %v485 = vpop.f32.mrf.mxu0
        %v486 = vpop.f32.mrf.mxu0
        %v487 = vadd.f32 0.0, %v486
        %v488 = vpop.f32.mrf.mxu0
        %489 = vdwg.mxu0
        %v494 = vunpack.c.l.b16 %v357
        %v495 = vunpack.c.l.b16 %v358
        %v496 = vunpack.c.l.b16 %v359
        %v497 = vunpack.c.l.b16 %v360
        %v498 = vpack.c.b16 %v495, %v494
        %v499 = vpack.c.b16 %v497, %v496
        %vm502 = vcmask 261120
        %v504 = vsel %vm502, %v341, 0
        %v507 = vsel %vm502, %v342, 0
        %v510 = vsel %vm502, %v343, 0
        %v513 = vsel %vm502, %v344, 0
        %515 = vmatprep.subr.bf16.mxu0 0
        %516 = vmatpush1.bf16.msra.mxu0 0
        %517 = vmatprep.subr.bf16.mxu0 0
        %518 = vmatpush1.bf16.msra.mxu0 0
        %519 = vmatprep.subr.bf16.mxu0 0
        %520 = vmatpush1.bf16.msra.mxu0 0
        %521 = vmatprep.subr.bf16.mxu0 0
        %522 = vmatpush1.bf16.msra.mxu0 0
        %523 = vmatprep.subr.bf16.mxu0 0
        %524 = vmatpush1.bf16.msra.mxu0 0
        %525 = vmatprep.subr.bf16.mxu0 0
        %526 = vmatpush1.bf16.msra.mxu0 0
        %527 = vmatprep.subr.bf16.mxu0 0
        %528 = vmatpush1.bf16.msra.mxu0 %v499
        %529 = vmatprep.subr.bf16.mxu0 0
        %530 = vmatpush1.bf16.msra.mxu0 %v498
        %531 = vmatprep.subr.bf16.mxu0 0
        %532 = vmatpush2.bf16.msra.mxu0 0
        %533 = vmatprep.subr.bf16.mxu0 0
        %534 = vmatpush2.bf16.msra.mxu0 0
        %535 = vmatprep.subr.bf16.mxu0 0
        %536 = vmatpush2.bf16.msra.mxu0 0
        %537 = vmatprep.subr.bf16.mxu0 0
        %538 = vmatpush2.bf16.msra.mxu0 0
        %539 = vmatprep.subr.bf16.mxu0 0
        %540 = vmatpush2.bf16.msra.mxu0 0
        %541 = vmatprep.subr.bf16.mxu0 0
        %542 = vmatpush2.bf16.msra.mxu0 0
        %543 = vmatprep.subr.bf16.mxu0 0
        %544 = vmatpush2.bf16.msra.mxu0 0
        %545 = vmatprep.subr.bf16.mxu0 0
        %546 = vmatpush2.bf16.msra.mxu0 0
        %547 = vmatprep.mubr.bf16.mxu0 0
        %548 = vmatmul.mubr.bf16.gmra.mxu0 %v504
        %v549 = vpop.f32.mrf.mxu0
        %v550 = vadd.f32 %v460, %v549
        %v551 = vpop.f32.mrf.mxu0
        %v552 = vpop.f32.mrf.mxu0
        %v553 = vadd.f32 %v463, %v552
        %v554 = vpop.f32.mrf.mxu0
        %555 = vmatprep.mubr.bf16.mxu0 0
        %556 = vmatmul.mubr.bf16.gmra.mxu0 %v507
        %v557 = vpop.f32.mrf.mxu0
        %v558 = vadd.f32 %v468, %v557
        %v559 = vpop.f32.mrf.mxu0
        %v560 = vpop.f32.mrf.mxu0
        %v561 = vadd.f32 %v471, %v560
        %v562 = vpop.f32.mrf.mxu0
        %563 = vmatprep.mubr.bf16.mxu0 0
        %564 = vmatmul.mubr.bf16.gmra.mxu0 %v510
        %v565 = vpop.f32.mrf.mxu0
        %v566 = vadd.f32 %v476, %v565
        %v567 = vpop.f32.mrf.mxu0
        %v568 = vpop.f32.mrf.mxu0
        %v569 = vadd.f32 %v479, %v568
        %v570 = vpop.f32.mrf.mxu0
        %571 = vmatprep.mubr.bf16.mxu0 0
        %572 = vmatmul.mubr.bf16.gmra.mxu0 %v513
        %v573 = vpop.f32.mrf.mxu0
        %v574 = vadd.f32 %v484, %v573
        %v575 = vpop.f32.mrf.mxu0
        %v576 = vpop.f32.mrf.mxu0
        %v577 = vadd.f32 %v487, %v576
        %v578 = vpop.f32.mrf.mxu0
        %579 = vdwg.mxu0
        %v580 = vld [vmem:[%s4] sm:$0x1]
        %v582 = vlaneseq
        %v583 = vshrl.u32 %v582, 7
        %v584 = vsub.s32 0, %v583
        %v585 = vrot.slane %v580, %v584
        %v587 = vadd.f32 %v550, %v585
        %v588 = vadd.f32 %v553, %v585
        %v589 = vadd.f32 %v558, %v585
        %v590 = vadd.f32 %v561, %v585
        %v591 = vadd.f32 %v566, %v585
        %v592 = vadd.f32 %v569, %v585
        %v593 = vadd.f32 %v574, %v585
        %v594 = vadd.f32 %v577, %v585
        %595 = vadd.xlane.f32.xlu0 %v587
        %v596 = vpop.xlane.xlu0 %595
        %597 = vadd.xlane.f32.xlu0 %v588
        %v598 = vpop.xlane.xlu0 %597
        %599 = vadd.xlane.f32.xlu0 %v589
        %v600 = vpop.xlane.xlu0 %599
        %601 = vadd.xlane.f32.xlu0 %v590
        %v602 = vpop.xlane.xlu0 %601
        %603 = vadd.xlane.f32.xlu0 %v591
        %v604 = vpop.xlane.xlu0 %603
        %605 = vadd.xlane.f32.xlu0 %v592
        %v606 = vpop.xlane.xlu0 %605
        %607 = vadd.xlane.f32.xlu0 %v593
        %v608 = vpop.xlane.xlu0 %607
        %609 = vadd.xlane.f32.xlu0 %v594
        %v610 = vpop.xlane.xlu0 %609
        %v611 = vrcp.pop 128.0
        %v612 = vmul.f32 %v596, %v611
        %v613 = vmul.f32 %v598, %v611
        %v614 = vmul.f32 %v600, %v611
        %v615 = vmul.f32 %v602, %v611
        %v616 = vmul.f32 %v604, %v611
        %v617 = vmul.f32 %v606, %v611
        %v618 = vmul.f32 %v608, %v611
        %v619 = vmul.f32 %v610, %v611
        %v620 = vsub.f32 %v587, %v612
        %v621 = vsub.f32 %v588, %v613
        %v622 = vsub.f32 %v589, %v614
        %v623 = vsub.f32 %v590, %v615
        %v624 = vsub.f32 %v591, %v616
        %v625 = vsub.f32 %v592, %v617
        %v626 = vsub.f32 %v593, %v618
        %v627 = vsub.f32 %v594, %v619
        %v628 = vmul.f32 %v620, %v620
        %v629 = vmul.f32 %v621, %v621
        %v630 = vmul.f32 %v622, %v622
        %v631 = vmul.f32 %v623, %v623
        %v632 = vmul.f32 %v624, %v624
        %v633 = vmul.f32 %v625, %v625
        %v634 = vmul.f32 %v626, %v626
        %v635 = vmul.f32 %v627, %v627
        %636 = vadd.xlane.f32.xlu0 %v628
        %v637 = vpop.xlane.xlu0 %636
        %638 = vadd.xlane.f32.xlu0 %v629
        %v639 = vpop.xlane.xlu0 %638
        %640 = vadd.xlane.f32.xlu0 %v630
        %v641 = vpop.xlane.xlu0 %640
        %642 = vadd.xlane.f32.xlu0 %v631
        %v643 = vpop.xlane.xlu0 %642
        %644 = vadd.xlane.f32.xlu0 %v632
        %v645 = vpop.xlane.xlu0 %644
        %646 = vadd.xlane.f32.xlu0 %v633
        %v647 = vpop.xlane.xlu0 %646
        %648 = vadd.xlane.f32.xlu0 %v634
        %v649 = vpop.xlane.xlu0 %648
        %650 = vadd.xlane.f32.xlu0 %v635
        %v651 = vpop.xlane.xlu0 %650
        %v652 = vmul.f32 %v637, %v611
        %v653 = vmul.f32 %v639, %v611
        %v654 = vmul.f32 %v641, %v611
        %v655 = vmul.f32 %v643, %v611
        %v656 = vmul.f32 %v645, %v611
        %v657 = vmul.f32 %v647, %v611
        %v658 = vmul.f32 %v649, %v611
        %v659 = vmul.f32 %v651, %v611
        %v660 = vadd.f32 %v652, 1e-05
        %v661 = vadd.f32 %v653, 1e-05
        %v662 = vadd.f32 %v654, 1e-05
        %v663 = vadd.f32 %v655, 1e-05
        %v664 = vadd.f32 %v656, 1e-05
        %v665 = vadd.f32 %v657, 1e-05
        %v666 = vadd.f32 %v658, 1e-05
        %v667 = vadd.f32 %v659, 1e-05
        %v668 = vrsqrt.pop %v660
        %v669 = vrsqrt.pop %v661
        %v670 = vrsqrt.pop %v662
        %v671 = vrsqrt.pop %v663
        %v672 = vrsqrt.pop %v664
        %v673 = vrsqrt.pop %v665
        %v674 = vrsqrt.pop %v666
        %v675 = vrsqrt.pop %v667
        %v676 = vmul.f32 %v620, %v668
        %v677 = vmul.f32 %v621, %v669
        %v678 = vmul.f32 %v622, %v670
        %v679 = vmul.f32 %v623, %v671
        %v680 = vmul.f32 %v624, %v672
        %v681 = vmul.f32 %v625, %v673
        %v682 = vmul.f32 %v626, %v674
        %v683 = vmul.f32 %v627, %v675
        %v684 = vpack.c.bf16 %v677, %v676
        %v685 = vpack.c.bf16 %v679, %v678
        %v686 = vpack.c.bf16 %v681, %v680
        %v687 = vpack.c.bf16 %v683, %v682
        %v688 = vld [vmem:[#allocation5] sm:$0xf]
        %v689 = vld [vmem:[#allocation5 + $0x4] sm:$0xf]
        %v690 = vld [vmem:[#allocation5 + $0x8] sm:$0xf]
        %v691 = vld [vmem:[#allocation5 + $0xc] sm:$0xf]
        %v692 = vld [vmem:[#allocation5 + $0x10] sm:$0xf]
        %v693 = vld [vmem:[#allocation5 + $0x14] sm:$0xf]
        %v694 = vld [vmem:[#allocation5 + $0x18] sm:$0xf]
        %v695 = vld [vmem:[#allocation5 + $0x1c] sm:$0xf]
        %v696 = vld [vmem:[#allocation5 + $0x20] sm:$0xf]
        %v697 = vld [vmem:[#allocation5 + $0x24] sm:$0xf]
        %v698 = vld [vmem:[#allocation5 + $0x28] sm:$0xf]
        %v699 = vld [vmem:[#allocation5 + $0x2c] sm:$0xf]
        %v700 = vld [vmem:[#allocation5 + $0x30] sm:$0xf]
        %v701 = vld [vmem:[#allocation5 + $0x34] sm:$0xf]
        %v702 = vld [vmem:[#allocation5 + $0x38] sm:$0xf]
        %v703 = vld [vmem:[#allocation5 + $0x3c] sm:$0xf]
        %v704 = vld [vmem:[%s6] sm:$0x1]
        %v706 = vlaneseq
        %v707 = vshrl.u32 %v706, 7
        %v708 = vsub.s32 0, %v707
        %v709 = vrot.slane %v704, %v708
        %v727 = vunpack.c.l.b16 %v688
        %v728 = vunpack.c.l.b16 %v689
        %v729 = vunpack.c.l.b16 %v690
        %v730 = vunpack.c.l.b16 %v691
        %v731 = vunpack.c.l.b16 %v692
        %v732 = vunpack.c.l.b16 %v693
        %v733 = vunpack.c.l.b16 %v694
        %v734 = vunpack.c.l.b16 %v695
        %v735 = vunpack.c.l.b16 %v696
        %v736 = vunpack.c.l.b16 %v697
        %v737 = vunpack.c.l.b16 %v698
        %v738 = vunpack.c.l.b16 %v699
        %v739 = vunpack.c.l.b16 %v700
        %v740 = vunpack.c.l.b16 %v701
        %v741 = vunpack.c.l.b16 %v702
        %v742 = vunpack.c.l.b16 %v703
        %v743 = vpack.c.b16 %v728, %v727
        %v744 = vpack.c.b16 %v730, %v729
        %v745 = vpack.c.b16 %v732, %v731
        %v746 = vpack.c.b16 %v734, %v733
        %v747 = vpack.c.b16 %v736, %v735
        %v748 = vpack.c.b16 %v738, %v737
        %v749 = vpack.c.b16 %v740, %v739
        %v750 = vpack.c.b16 %v742, %v741
        %759 = vmatprep.subr.bf16.mxu0 0
        %760 = vmatpush1.bf16.msra.mxu0 %v750
        %761 = vmatprep.subr.bf16.mxu0 0
        %762 = vmatpush1.bf16.msra.mxu0 %v749
        %763 = vmatprep.subr.bf16.mxu0 0
        %764 = vmatpush1.bf16.msra.mxu0 %v748
        %765 = vmatprep.subr.bf16.mxu0 0
        %766 = vmatpush1.bf16.msra.mxu0 %v747
        %767 = vmatprep.subr.bf16.mxu0 0
        %768 = vmatpush1.bf16.msra.mxu0 %v746
        %769 = vmatprep.subr.bf16.mxu0 0
        %770 = vmatpush1.bf16.msra.mxu0 %v745
        %771 = vmatprep.subr.bf16.mxu0 0
        %772 = vmatpush1.bf16.msra.mxu0 %v744
        %773 = vmatprep.subr.bf16.mxu0 0
        %774 = vmatpush1.bf16.msra.mxu0 %v743
        %775 = vmatprep.subr.bf16.mxu0 0
        %776 = vmatpush2.bf16.msra.mxu0 0
        %777 = vmatprep.subr.bf16.mxu0 0
        %778 = vmatpush2.bf16.msra.mxu0 0
        %779 = vmatprep.subr.bf16.mxu0 0
        %780 = vmatpush2.bf16.msra.mxu0 0
        %781 = vmatprep.subr.bf16.mxu0 0
        %782 = vmatpush2.bf16.msra.mxu0 0
        %783 = vmatprep.subr.bf16.mxu0 0
        %784 = vmatpush2.bf16.msra.mxu0 0
        %785 = vmatprep.subr.bf16.mxu0 0
        %786 = vmatpush2.bf16.msra.mxu0 0
        %787 = vmatprep.subr.bf16.mxu0 0
        %788 = vmatpush2.bf16.msra.mxu0 0
        %789 = vmatprep.subr.bf16.mxu0 0
        %790 = vmatpush2.bf16.msra.mxu0 0
        %791 = vmatprep.mubr.bf16.mxu0 0
        %792 = vmatmul.mubr.bf16.gmra.mxu0 %v684
        %v793 = vpop.f32.mrf.mxu0
        %v794 = vadd.f32 %v709, %v793
        %v795 = vpop.f32.mrf.mxu0
        %v796 = vpop.f32.mrf.mxu0
        %v797 = vadd.f32 %v709, %v796
        %v798 = vpop.f32.mrf.mxu0
        %799 = vmatprep.mubr.bf16.mxu0 0
        %800 = vmatmul.mubr.bf16.gmra.mxu0 %v685
        %v801 = vpop.f32.mrf.mxu0
        %v802 = vadd.f32 %v709, %v801
        %v803 = vpop.f32.mrf.mxu0
        %v804 = vpop.f32.mrf.mxu0
        %v805 = vadd.f32 %v709, %v804
        %v806 = vpop.f32.mrf.mxu0
        %807 = vmatprep.mubr.bf16.mxu0 0
        %808 = vmatmul.mubr.bf16.gmra.mxu0 %v686
        %v809 = vpop.f32.mrf.mxu0
        %v810 = vadd.f32 %v709, %v809
        %v811 = vpop.f32.mrf.mxu0
        %v812 = vpop.f32.mrf.mxu0
        %v813 = vadd.f32 %v709, %v812
        %v814 = vpop.f32.mrf.mxu0
        %815 = vmatprep.mubr.bf16.mxu0 0
        %816 = vmatmul.mubr.bf16.gmra.mxu0 %v687
        %v817 = vpop.f32.mrf.mxu0
        %v818 = vadd.f32 %v709, %v817
        %v819 = vpop.f32.mrf.mxu0
        %v820 = vpop.f32.mrf.mxu0
        %v821 = vadd.f32 %v709, %v820
        %v822 = vpop.f32.mrf.mxu0
        %823 = vdwg.mxu0
        %824 = vst [vmem:[%s318] sm:$0xff] %v794
        %825 = vst [vmem:[%s318 + $0x8] sm:$0xff] %v797
        %826 = vst [vmem:[%s318 + $0x10] sm:$0xff] %v802
        %827 = vst [vmem:[%s318 + $0x18] sm:$0xff] %v805
        %828 = vst [vmem:[%s318 + $0x20] sm:$0xff] %v810
        %829 = vst [vmem:[%s318 + $0x28] sm:$0xff] %v813
        %830 = vst [vmem:[%s318 + $0x30] sm:$0xff] %v818
        %831 = vst [vmem:[%s318 + $0x38] sm:$0xff] %v821
        %s832 = sand.u32 %s188, 1
        %s833 = scalar_lea.sflag [#allocation4], %s832
        %s834 = sand.u32 %s188, 1
        %s835 = smul.addr %s834, 64
        %s836 = scalar_lea.vmem [#allocation7], %s835
        // Predicated region
        $region57: #{tpu_custom_call.1} parent=47 // pred_check
          %p837 = pneg %p198
        $region58: #{tpu_custom_call.1} parent=47 // pred_check_branch
          %839 = sbr.rel (%p837) target = $region60
        $region59: #{tpu_custom_call.1} parent=47 // pred_region
          %s840 = smul.u32 8, %s23
          %s842 = ssub.s32 1024, 1024
          %843 = vsyncadd %s833, %s842
          %s844 = smul.addr %s840, 128
          %s845 = scalar_lea.hbm %s7, %s844
          %s846 = sshll.u32 %s836, 4
          %s847 = int_to_ptr.vmem [resolvable:$true] %s846
          %852 = dma.vmem_to_hbm [thread:$0]  %s847, 1024, %s845, %s833, 128, 128, 8
        $region60: #{tpu_custom_call.1} parent=47 // pred_fallthru
          _
      $region48: #{tpu_custom_call.1} parent=5 // pred_fallthru
        _
      %p853 = scmp.le.s32.totalorder 2, %s18
      // Predicated region
      $region61: #{tpu_custom_call.1} parent=5 // pred_check
        %p854 = pneg %p853
      $region62: #{tpu_custom_call.1} parent=5 // pred_check_branch
        %856 = sbr.rel (%p854) target = $region64
      $region63: #{tpu_custom_call.1} parent=5 // pred_region
        %s857 = ssub.s32 %s18, 2
        // Predicated region
        $region65: #{tpu_custom_call.1} parent=63 // pred_check
          %p858 = pneg %p204
        $region66: #{tpu_custom_call.1} parent=63 // pred_check_branch
          %860 = sbr.rel (%p858) target = $region68
        $region67: #{tpu_custom_call.1} parent=63 // pred_region
          %s861 = sand.u32 %s189, 1
          %s862 = scalar_lea.sflag [#allocation4], %s861
          %s863 = sand.u32 %s189, 1
          %s864 = smul.addr %s863, 64
          %s865 = scalar_lea.vmem [#allocation7], %s864
          %866 = dma.done %s862, 1024
        $region68: #{tpu_custom_call.1} parent=63 // pred_fallthru
          _
      $region64: #{tpu_custom_call.1} parent=5 // pred_fallthru
        _
    $region6: #{tpu_custom_call.1} parent=1 // loop_footer
      %s22 = sadd.s32 1, %s18
    $region7: #{tpu_custom_call.1} parent=1 // loop_footer_branch
      %17 = sbr.rel target = $region3
    $region8: #{tpu_custom_call.1} parent=1 // loop_exit
      _
    %867 = vsyncpa [#allocation3], 1
    %s868 = scalar_lea.sflag [#allocation3], 1
    %869 = vsyncpa %s868, 1
    %870 = vsyncpa [#allocation6], 1
    %871 = vsyncpa [#allocation4], 1
    %s872 = scalar_lea.sflag [#allocation4], 1
    %873 = vsyncpa %s872, 1

// kernel: tpu_custom_call.1
$region0: #{tpu_custom_call.1}
  #allocation0 [shape = 'u32[]', space=smem, size = 0x4, offset = 0x4, fixed_abs, tag = 'smem constant byte address 0x4 - core index']
  #allocation1 [shape = 'u32[144,128]{1,0:T(1,128)}', space=vmem, size = 0x12000, scoped, tag = 'internal scratch']
  %s0 = inlined_call_operand.vmem [shape: f32[256,32], index: 0, kind: input, shape index: {}]
  %s1 = inlined_call_operand.vmem [shape: f32[256,128], index: 1, kind: input, shape index: {}]
  %s2 = inlined_call_operand.hbm [shape: bf16[32,128], index: 2, kind: input, shape index: {}]
  %s3 = inlined_call_operand.vmem [shape: bf16[128,128], index: 3, kind: input, shape index: {}]
  %s4 = inlined_call_operand.vmem [shape: f32[1,128], index: 4, kind: input, shape index: {}]
  %s5 = inlined_call_operand.hbm [shape: bf16[128,128], index: 5, kind: input, shape index: {}]
  %s6 = inlined_call_operand.vmem [shape: f32[1,128], index: 6, kind: input, shape index: {}]
  %s7 = inlined_call_operand.hbm [shape: f32[256,128], index: 7, kind: output, shape index: {}]
  %s8 = sld [smem:[#allocation0]]
  $region69: #{tpu_custom_call.1} parent=0
    _
  %s10 = ssub.s32 1, %s8
  %s11 = scalar_select 0, %s10, %s8
  $region1: #{tpu_custom_call.1} parent=0
    #allocation2 [shape = 'u8[8192]{0}', space=vmem, size = 0x2000, scoped, tag = 'input window, operand 2, single buffered']
    #allocation3 [shape = 's32[2]{0}', space=sflag, size = 0x8, scoped, tag = 'scoped memory for tpu_custom_call.1']
    #allocation4 [shape = 's32[2]{0}', space=sflag, size = 0x8, scoped, tag = 'scoped memory for tpu_custom_call.1']
    #allocation5 [shape = 'u8[32768]{0}', space=vmem, size = 0x8000, scoped, tag = 'input window, operand 5, single buffered']
    #allocation6 [shape = 's32[1]{0}', space=sflag, size = 0x4, scoped, tag = 'scoped memory for tpu_custom_call.1']
    #allocation7 [shape = 'u8[65536]{0}', space=vmem, size = 0x10000, scoped, tag = 'output window, operand 0']
    %12 = vsyncpa [#allocation3], 0
    %13 = vsyncpa [#allocation6], 0
    %14 = vsyncpa [#allocation4], 0
    %s15 = scalar_lea.sflag [#allocation4], 1
    %16 = vsyncpa %s15, 0
    loop: start=0, step=1, limit=6
    $region2: #{tpu_custom_call.1} parent=1 // loop_pre_header
      _
    $region3: #{tpu_custom_call.1} parent=1 // loop_header
      %s18 = sphi 0, %s22
      %p19 = scmp.ge.s32.totalorder %s18, 6
      %s28 = sphi 0, %s30
      %s31 = sphi 0, %s28
      %s32 = sphi 0, %s31
      %s48 = sphi 0, %s32
      %s54 = sphi 0, %s56
      %s57 = sphi 0, %s54
      %s58 = sphi 0, %s57
      %s74 = sphi 0, %s58
      %s78 = sphi 0, %s78
      %s80 = sphi 0, %s78
      %s81 = sphi 0, %s80
      %s95 = sphi 0, %s81
      %s99 = sphi 0, %s99
      %s101 = sphi 0, %s99
      %s102 = sphi 0, %s101
      %s116 = sphi 0, %s102
      %s120 = sphi 0, %s120
      %s122 = sphi 0, %s120
      %s123 = sphi 0, %s122
      %s137 = sphi 0, %s123
      %s141 = sphi 0, %s141
      %s143 = sphi 0, %s141
      %s144 = sphi 0, %s143
      %s158 = sphi 0, %s144
      %s162 = sphi 0, %s162
      %s164 = sphi 0, %s162
      %s165 = sphi 0, %s164
      %s179 = sphi 0, %s165
      %s185 = sphi 0, %s187
      %s188 = sphi 0, %s185
      %s189 = sphi 0, %s188
      %s205 = sphi 0, %s189
    $region4: #{tpu_custom_call.1} parent=1 // loop_header_branch
      %21 = sbr.rel (%p19) target = $region8
    $region5: #{tpu_custom_call.1} parent=1 // loop_body
      %s23 = ssub.s32 %s18, 1
      %s24 = ssub.s32 %s18, 2
      %s25 = sadd.s32 %s18, 1
      %s26 = ssub.s32 %s18, %s25
      %p27 = scmp.eq.s32.totalorder %s26, 0
      %s29 = sadd.s32 %s28, 1
      %s30 = scalar_select %p27, %s28, %s29
      %p33 = pneg %p27
      %p34 = scmp.eq.s32.totalorder %s18, 3
      %p35 = por %p33, %p34
      %p36 = scmp.ne.s32.totalorder %s28, %s31
      %p37 = scmp.eq.s32.totalorder %s18, 0
      %p38 = por %p36, %p37
      %p39 = scmp.ne.s32.totalorder %s28, %s31
      %p40 = scmp.eq.s32.totalorder %s23, 3
      %p41 = por %p39, %p40
      %p42 = scmp.ne.s32.totalorder %s31, %s32
      %p43 = scmp.eq.s32.totalorder %s23, 0
      %p44 = por %p42, %p43
      %p45 = scmp.ne.s32.totalorder %s31, %s32
      %p46 = scmp.eq.s32.totalorder %s24, 3
      %p47 = por %p45, %p46
      %p49 = scmp.ne.s32.totalorder %s32, %s48
      %p50 = scmp.eq.s32.totalorder %s24, 0
      %p51 = por %p49, %p50
      %s52 = ssub.s32 %s18, %s25
      %p53 = scmp.eq.s32.totalorder %s52, 0
      %s55 = sadd.s32 %s54, 1
      %s56 = scalar_select %p53, %s54, %s55
      %p59 = pneg %p53
      %p60 = scmp.eq.s32.totalorder %s18, 3
      %p61 = por %p59, %p60
      %p62 = scmp.ne.s32.totalorder %s54, %s57
      %p63 = scmp.eq.s32.totalorder %s18, 0
      %p64 = por %p62, %p63
      %p65 = scmp.ne.s32.totalorder %s54, %s57
      %p66 = scmp.eq.s32.totalorder %s23, 3
      %p67 = por %p65, %p66
      %p68 = scmp.ne.s32.totalorder %s57, %s58
      %p69 = scmp.eq.s32.totalorder %s23, 0
      %p70 = por %p68, %p69
      %p71 = scmp.ne.s32.totalorder %s57, %s58
      %p72 = scmp.eq.s32.totalorder %s24, 3
      %p73 = por %p71, %p72
      %p75 = scmp.ne.s32.totalorder %s58, %s74
      %p76 = scmp.eq.s32.totalorder %s24, 0
      %p77 = por %p75, %p76
      %s79 = sadd.s32 %s78, 1
      %p82 = scmp.eq.s32.totalorder %s18, 3
      %p83 = scmp.ne.s32.totalorder %s78, %s80
      %p84 = scmp.eq.s32.totalorder %s18, 0
      %p85 = por %p83, %p84
      %p86 = scmp.ne.s32.totalorder %s78, %s80
      %p87 = scmp.eq.s32.totalorder %s23, 3
      %p88 = por %p86, %p87
      %p89 = scmp.ne.s32.totalorder %s80, %s81
      %p90 = scmp.eq.s32.totalorder %s23, 0
      %p91 = por %p89, %p90
      %p92 = scmp.ne.s32.totalorder %s80, %s81
      %p93 = scmp.eq.s32.totalorder %s24, 3
      %p94 = por %p92, %p93
      %p96 = scmp.ne.s32.totalorder %s81, %s95
      %p97 = scmp.eq.s32.totalorder %s24, 0
      %p98 = por %p96, %p97
      %s100 = sadd.s32 %s99, 1
      %p103 = scmp.eq.s32.totalorder %s18, 3
      %p104 = scmp.ne.s32.totalorder %s99, %s101
      %p105 = scmp.eq.s32.totalorder %s18, 0
      %p106 = por %p104, %p105
      %p107 = scmp.ne.s32.totalorder %s99, %s101
      %p108 = scmp.eq.s32.totalorder %s23, 3
      %p109 = por %p107, %p108
      %p110 = scmp.ne.s32.totalorder %s101, %s102
      %p111 = scmp.eq.s32.totalorder %s23, 0
      %p112 = por %p110, %p111
      %p113 = scmp.ne.s32.totalorder %s101, %s102
      %p114 = scmp.eq.s32.totalorder %s24, 3
      %p115 = por %p113, %p114
      %p117 = scmp.ne.s32.totalorder %s102, %s116
      %p118 = scmp.eq.s32.totalorder %s24, 0
      %p119 = por %p117, %p118
      %s121 = sadd.s32 %s120, 1
      %p124 = scmp.eq.s32.totalorder %s18, 3
      %p125 = scmp.ne.s32.totalorder %s120, %s122
      %p126 = scmp.eq.s32.totalorder %s18, 0
      %p127 = por %p125, %p126
      %p128 = scmp.ne.s32.totalorder %s120, %s122
      %p129 = scmp.eq.s32.totalorder %s23, 3
      %p130 = por %p128, %p129
      %p131 = scmp.ne.s32.totalorder %s122, %s123
      %p132 = scmp.eq.s32.totalorder %s23, 0
      %p133 = por %p131, %p132
      %p134 = scmp.ne.s32.totalorder %s122, %s123
      %p135 = scmp.eq.s32.totalorder %s24, 3
      %p136 = por %p134, %p135
      %p138 = scmp.ne.s32.totalorder %s123, %s137
      %p139 = scmp.eq.s32.totalorder %s24, 0
      %p140 = por %p138, %p139
      %s142 = sadd.s32 %s141, 1
      %p145 = scmp.eq.s32.totalorder %s18, 3
      %p146 = scmp.ne.s32.totalorder %s141, %s143
      %p147 = scmp.eq.s32.totalorder %s18, 0
      %p148 = por %p146, %p147
      %p149 = scmp.ne.s32.totalorder %s141, %s143
      %p150 = scmp.eq.s32.totalorder %s23, 3
      %p151 = por %p149, %p150
      %p152 = scmp.ne.s32.totalorder %s143, %s144
      %p153 = scmp.eq.s32.totalorder %s23, 0
      %p154 = por %p152, %p153
      %p155 = scmp.ne.s32.totalorder %s143, %s144
      %p156 = scmp.eq.s32.totalorder %s24, 3
      %p157 = por %p155, %p156
      %p159 = scmp.ne.s32.totalorder %s144, %s158
      %p160 = scmp.eq.s32.totalorder %s24, 0
      %p161 = por %p159, %p160
      %s163 = sadd.s32 %s162, 1
      %p166 = scmp.eq.s32.totalorder %s18, 3
      %p167 = scmp.ne.s32.totalorder %s162, %s164
      %p168 = scmp.eq.s32.totalorder %s18, 0
      %p169 = por %p167, %p168
      %p170 = scmp.ne.s32.totalorder %s162, %s164
      %p171 = scmp.eq.s32.totalorder %s23, 3
      %p172 = por %p170, %p171
      %p173 = scmp.ne.s32.totalorder %s164, %s165
      %p174 = scmp.eq.s32.totalorder %s23, 0
      %p175 = por %p173, %p174
      %p176 = scmp.ne.s32.totalorder %s164, %s165
      %p177 = scmp.eq.s32.totalorder %s24, 3
      %p178 = por %p176, %p177
      %p180 = scmp.ne.s32.totalorder %s165, %s179
      %p181 = scmp.eq.s32.totalorder %s24, 0
      %p182 = por %p180, %p181
      %s183 = ssub.s32 %s18, %s25
      %p184 = scmp.eq.s32.totalorder %s183, 0
      %s186 = sadd.s32 %s185, 1
      %s187 = scalar_select %p184, %s185, %s186
      %p190 = pneg %p184
      %p191 = scmp.eq.s32.totalorder %s18, 3
      %p192 = por %p190, %p191
      %p193 = scmp.ne.s32.totalorder %s185, %s188
      %p194 = scmp.eq.s32.totalorder %s18, 0
      %p195 = por %p193, %p194
      %p196 = scmp.ne.s32.totalorder %s185, %s188
      %p197 = scmp.eq.s32.totalorder %s23, 3
      %p198 = por %p196, %p197
      %p199 = scmp.ne.s32.totalorder %s188, %s189
      %p200 = scmp.eq.s32.totalorder %s23, 0
      %p201 = por %p199, %p200
      %p202 = scmp.ne.s32.totalorder %s188, %s189
      %p203 = scmp.eq.s32.totalorder %s24, 3
      %p204 = por %p202, %p203
      %p206 = scmp.ne.s32.totalorder %s189, %s205
      %p207 = scmp.eq.s32.totalorder %s24, 0
      %p208 = por %p206, %p207
      %p209 = scmp.le.s32.totalorder 1, %s18
      %p210 = scmp.lt.s32.totalorder %s18, 5
      %p211 = pnand %p209, %p210
      %p212 = pneg %p211
      // Predicated region
      $region9: #{tpu_custom_call.1} parent=5 // pred_check
        _
      $region10: #{tpu_custom_call.1} parent=5 // pred_check_branch
        %214 = sbr.rel (%p211) target = $region12
      $region11: #{tpu_custom_call.1} parent=5 // pred_region
        %s215 = ssub.s32 %s18, 1
        // Predicated region
        $region13: #{tpu_custom_call.1} parent=11 // pred_check
          %p216 = pneg %p91
        $region14: #{tpu_custom_call.1} parent=11 // pred_check_branch
          %218 = sbr.rel (%p216) target = $region16
        $region15: #{tpu_custom_call.1} parent=11 // pred_region
          %s220 = ssub.s32 256, 256
          %221 = vsyncadd [#allocation3], %s220
          %s222 = sshll.u32 [#allocation2], 4
          %s223 = int_to_ptr.vmem [resolvable:$true] %s222
          %228 = dma.hbm_to_vmem [thread:$0]  %s2, 256, %s223, [#allocation3], 64, 64, 4
        $region16: #{tpu_custom_call.1} parent=11 // pred_fallthru
          _
        // Predicated region
        $region17: #{tpu_custom_call.1} parent=11 // pred_check
          %p229 = pneg %p112
        $region18: #{tpu_custom_call.1} parent=11 // pred_check_branch
          %231 = sbr.rel (%p229) target = $region20
        $region19: #{tpu_custom_call.1} parent=11 // pred_region
          _
        $region20: #{tpu_custom_call.1} parent=11 // pred_fallthru
          _
        // Predicated region
        $region21: #{tpu_custom_call.1} parent=11 // pred_check
          %p232 = pneg %p133
        $region22: #{tpu_custom_call.1} parent=11 // pred_check_branch
          %234 = sbr.rel (%p232) target = $region24
        $region23: #{tpu_custom_call.1} parent=11 // pred_region
          _
        $region24: #{tpu_custom_call.1} parent=11 // pred_fallthru
          _
        // Predicated region
        $region25: #{tpu_custom_call.1} parent=11 // pred_check
          %p235 = pneg %p154
        $region26: #{tpu_custom_call.1} parent=11 // pred_check_branch
          %237 = sbr.rel (%p235) target = $region28
        $region27: #{tpu_custom_call.1} parent=11 // pred_region
          %s239 = ssub.s32 1024, 1024
          %240 = vsyncadd [#allocation6], %s239
          %s241 = sshll.u32 [#allocation5], 4
          %s242 = int_to_ptr.vmem [resolvable:$true] %s241
          %247 = dma.hbm_to_vmem [thread:$0]  %s5, 1024, %s242, [#allocation6], 64, 64, 4
        $region28: #{tpu_custom_call.1} parent=11 // pred_fallthru
          _
        // Predicated region
        $region29: #{tpu_custom_call.1} parent=11 // pred_check
          %p248 = pneg %p175
        $region30: #{tpu_custom_call.1} parent=11 // pred_check_branch
          %250 = sbr.rel (%p248) target = $region32
        $region31: #{tpu_custom_call.1} parent=11 // pred_region
          _
        $region32: #{tpu_custom_call.1} parent=11 // pred_fallthru
          _
      $region12: #{tpu_custom_call.1} parent=5 // pred_fallthru
        _
      %p251 = scmp.lt.s32.totalorder %s18, 4
      // Predicated region
      $region33: #{tpu_custom_call.1} parent=5 // pred_check
        %p252 = pneg %p251
      $region34: #{tpu_custom_call.1} parent=5 // pred_check_branch
        %254 = sbr.rel (%p252) target = $region36
      $region35: #{tpu_custom_call.1} parent=5 // pred_region
        // Predicated region
        $region37: #{tpu_custom_call.1} parent=35 // pred_check
          %p255 = pneg %p38
        $region38: #{tpu_custom_call.1} parent=35 // pred_check_branch
          %257 = sbr.rel (%p255) target = $region40
        $region39: #{tpu_custom_call.1} parent=35 // pred_region
          %s258 = smul.u32 8, %s18
          %p259 = scmp.lt.s32.totalorder %s258, 31
          %s260 = scalar_select %p259, %s258, 31
          %s261 = smul.addr %s260, 8
          %s262 = scalar_lea.vmem %s0, %s261
          %s263 = smul.u32 8, %s18
        $region40: #{tpu_custom_call.1} parent=35 // pred_fallthru
          _
        // Predicated region
        $region41: #{tpu_custom_call.1} parent=35 // pred_check
          %p264 = pneg %p64
        $region42: #{tpu_custom_call.1} parent=35 // pred_check_branch
          %266 = sbr.rel (%p264) target = $region44
        $region43: #{tpu_custom_call.1} parent=35 // pred_region
          %s267 = smul.u32 8, %s18
          %p268 = scmp.lt.s32.totalorder %s267, 31
          %s269 = scalar_select %p268, %s267, 31
          %s270 = smul.addr %s269, 8
          %s271 = scalar_lea.vmem %s1, %s270
          %s272 = smul.u32 8, %s18
        $region44: #{tpu_custom_call.1} parent=35 // pred_fallthru
          _
      $region36: #{tpu_custom_call.1} parent=5 // pred_fallthru
        _
      %p273 = scmp.le.s32.totalorder 1, %s18
      %p274 = scmp.lt.s32.totalorder %s18, 5
      %p275 = pnand %p273, %p274
      %p276 = pneg %p275
      // Predicated region
      $region45: #{tpu_custom_call.1} parent=5 // pred_check
        _
      $region46: #{tpu_custom_call.1} parent=5 // pred_check_branch
        %278 = sbr.rel (%p275) target = $region48
      $region47: #{tpu_custom_call.1} parent=5 // pred_region
        %s279 = ssub.s32 %s18, 1
        // Predicated region
        $region49: #{tpu_custom_call.1} parent=47 // pred_check
          %p280 = pneg %p91
        $region50: #{tpu_custom_call.1} parent=47 // pred_check_branch
          %282 = sbr.rel (%p280) target = $region52
        $region51: #{tpu_custom_call.1} parent=47 // pred_region
          %283 = dma.done [#allocation3], 256
        $region52: #{tpu_custom_call.1} parent=47 // pred_fallthru
          _
        // Predicated region
        $region53: #{tpu_custom_call.1} parent=47 // pred_check
          %p284 = pneg %p154
        $region54: #{tpu_custom_call.1} parent=47 // pred_check_branch
          %286 = sbr.rel (%p284) target = $region56
        $region55: #{tpu_custom_call.1} parent=47 // pred_region
          %287 = dma.done [#allocation6], 1024
        $region56: #{tpu_custom_call.1} parent=47 // pred_fallthru
          _
        %s288 = smul.u32 8, %s23
        %p289 = scmp.lt.s32.totalorder %s288, 31
        %s290 = scalar_select %p289, %s288, 31
        %s291 = smul.addr %s290, 8
        %s292 = scalar_lea.vmem %s0, %s291
        %p293 = pneg %p44
        %p294 = pneg %p41
        %s295 = smul.u32 8, %s23
        %p296 = scmp.lt.s32.totalorder %s295, 31
        %s297 = scalar_select %p296, %s295, 31
        %s298 = smul.addr %s297, 8
        %s299 = scalar_lea.vmem %s1, %s298
        %p300 = pneg %p70
        %p301 = pneg %p67
        %p302 = pneg %p91
        %p303 = pneg %p88
        %p304 = pneg %p112
        %p305 = pneg %p109
        %p306 = pneg %p133
        %p307 = pneg %p130
        %p308 = pneg %p154
        %p309 = pneg %p151
        %p310 = pneg %p175
        %p311 = pneg %p172
        %p312 = pneg %p201
        %p313 = pneg %p198
        %s314 = sand.u32 %s188, 1
        %s315 = scalar_lea.sflag [#allocation4], %s314
        %s316 = sand.u32 %s188, 1
        %s317 = smul.addr %s316, 64
        %s318 = scalar_lea.vmem [#allocation7], %s317
        %s319 = smul.u32 8, %s23
        %p320 = scmp.lt.s32.totalorder %s319, 31
        %s321 = scalar_select %p320, %s319, 31
        %s322 = smul.addr %s321, 8
        %s323 = scalar_lea.vmem %s0, %s322
        %s324 = smul.u32 8, %s23
        %s325 = smul.u32 8, %s23
        %p326 = scmp.lt.s32.totalorder %s325, 31
        %s327 = scalar_select %p326, %s325, 31
        %s328 = smul.addr %s327, 8
        %s329 = scalar_lea.vmem %s1, %s328
        %s330 = smul.u32 8, %s23
        %s331 = smul.u32 8, %s23
        %v333 = vld [vmem:[%s323] sm:$0xff]
        %v334 = vld [vmem:[%s323 + $0x8] sm:$0xff]
        %v335 = vld [vmem:[%s323 + $0x10] sm:$0xff]
        %v336 = vld [vmem:[%s323 + $0x18] sm:$0xff]
        %v337 = vld [vmem:[%s323 + $0x20] sm:$0xff]
        %v338 = vld [vmem:[%s323 + $0x28] sm:$0xff]
        %v339 = vld [vmem:[%s323 + $0x30] sm:$0xff]
        %v340 = vld [vmem:[%s323 + $0x38] sm:$0xff]
        %v341 = vpack.c.bf16 %v334, %v333
        %v342 = vpack.c.bf16 %v336, %v335
        %v343 = vpack.c.bf16 %v338, %v337
        %v344 = vpack.c.bf16 %v340, %v339
        %v345 = vld [vmem:[%s329] sm:$0xff]
        %v346 = vld [vmem:[%s329 + $0x8] sm:$0xff]
        %v347 = vld [vmem:[%s329 + $0x10] sm:$0xff]
        %v348 = vld [vmem:[%s329 + $0x18] sm:$0xff]
        %v349 = vld [vmem:[%s329 + $0x20] sm:$0xff]
        %v350 = vld [vmem:[%s329 + $0x28] sm:$0xff]
        %v351 = vld [vmem:[%s329 + $0x30] sm:$0xff]
        %v352 = vld [vmem:[%s329 + $0x38] sm:$0xff]
        %v353 = vpack.c.bf16 %v346, %v345
        %v354 = vpack.c.bf16 %v348, %v347
        %v355 = vpack.c.bf16 %v350, %v349
        %v356 = vpack.c.bf16 %v352, %v351
        %v357 = vld [vmem:[#allocation2] sm:$0xf]
        %v358 = vld [vmem:[#allocation2 + $0x4] sm:$0xf]
        %v359 = vld [vmem:[#allocation2 + $0x8] sm:$0xf]
        %v360 = vld [vmem:[#allocation2 + $0xc] sm:$0xf]
        %v361 = vld [vmem:[%s3] sm:$0xf]
        %v362 = vld [vmem:[%s3 + $0x4] sm:$0xf]
        %v363 = vld [vmem:[%s3 + $0x8] sm:$0xf]
        %v364 = vld [vmem:[%s3 + $0xc] sm:$0xf]
        %v365 = vld [vmem:[%s3 + $0x10] sm:$0xf]
        %v366 = vld [vmem:[%s3 + $0x14] sm:$0xf]
        %v367 = vld [vmem:[%s3 + $0x18] sm:$0xf]
        %v368 = vld [vmem:[%s3 + $0x1c] sm:$0xf]
        %v369 = vld [vmem:[%s3 + $0x20] sm:$0xf]
        %v370 = vld [vmem:[%s3 + $0x24] sm:$0xf]
        %v371 = vld [vmem:[%s3 + $0x28] sm:$0xf]
        %v372 = vld [vmem:[%s3 + $0x2c] sm:$0xf]
        %v373 = vld [vmem:[%s3 + $0x30] sm:$0xf]
        %v374 = vld [vmem:[%s3 + $0x34] sm:$0xf]
        %v375 = vld [vmem:[%s3 + $0x38] sm:$0xf]
        %v376 = vld [vmem:[%s3 + $0x3c] sm:$0xf]
        %v393 = vunpack.c.l.b16 %v361
        %v394 = vunpack.c.l.b16 %v362
        %v395 = vunpack.c.l.b16 %v363
        %v396 = vunpack.c.l.b16 %v364
        %v397 = vunpack.c.l.b16 %v365
        %v398 = vunpack.c.l.b16 %v366
        %v399 = vunpack.c.l.b16 %v367
        %v400 = vunpack.c.l.b16 %v368
        %v401 = vunpack.c.l.b16 %v369
        %v402 = vunpack.c.l.b16 %v370
        %v403 = vunpack.c.l.b16 %v371
        %v404 = vunpack.c.l.b16 %v372
        %v405 = vunpack.c.l.b16 %v373
        %v406 = vunpack.c.l.b16 %v374
        %v407 = vunpack.c.l.b16 %v375
        %v408 = vunpack.c.l.b16 %v376
        %v409 = vpack.c.b16 %v394, %v393
        %v410 = vpack.c.b16 %v396, %v395
        %v411 = vpack.c.b16 %v398, %v397
        %v412 = vpack.c.b16 %v400, %v399
        %v413 = vpack.c.b16 %v402, %v401
        %v414 = vpack.c.b16 %v404, %v403
        %v415 = vpack.c.b16 %v406, %v405
        %v416 = vpack.c.b16 %v408, %v407
        %425 = vmatprep.subr.bf16.mxu0 0
        %426 = vmatpush1.bf16.msra.mxu0 %v416
        %427 = vmatprep.subr.bf16.mxu0 0
        %428 = vmatpush1.bf16.msra.mxu0 %v415
        %429 = vmatprep.subr.bf16.mxu0 0
        %430 = vmatpush1.bf16.msra.mxu0 %v414
        %431 = vmatprep.subr.bf16.mxu0 0
        %432 = vmatpush1.bf16.msra.mxu0 %v413
        %433 = vmatprep.subr.bf16.mxu0 0
        %434 = vmatpush1.bf16.msra.mxu0 %v412
        %435 = vmatprep.subr.bf16.mxu0 0
        %436 = vmatpush1.bf16.msra.mxu0 %v411
        %437 = vmatprep.subr.bf16.mxu0 0
        %438 = vmatpush1.bf16.msra.mxu0 %v410
        %439 = vmatprep.subr.bf16.mxu0 0
        %440 = vmatpush1.bf16.msra.mxu0 %v409
        %441 = vmatprep.subr.bf16.mxu0 0
        %442 = vmatpush2.bf16.msra.mxu0 0
        %443 = vmatprep.subr.bf16.mxu0 0
        %444 = vmatpush2.bf16.msra.mxu0 0
        %445 = vmatprep.subr.bf16.mxu0 0
        %446 = vmatpush2.bf16.msra.mxu0 0
        %447 = vmatprep.subr.bf16.mxu0 0
        %448 = vmatpush2.bf16.msra.mxu0 0
        %449 = vmatprep.subr.bf16.mxu0 0
        %450 = vmatpush2.bf16.msra.mxu0 0
        %451 = vmatprep.subr.bf16.mxu0 0
        %452 = vmatpush2.bf16.msra.mxu0 0
        %453 = vmatprep.subr.bf16.mxu0 0
        %454 = vmatpush2.bf16.msra.mxu0 0
        %455 = vmatprep.subr.bf16.mxu0 0
        %456 = vmatpush2.bf16.msra.mxu0 0
        %457 = vmatprep.mubr.bf16.mxu0 0
        %458 = vmatmul.mubr.bf16.gmra.mxu0 %v353
        %v459 = vpop.f32.mrf.mxu0
        %v460 = vadd.f32 0.0, %v459
        %v461 = vpop.f32.mrf.mxu0
        %v462 = vpop.f32.mrf.mxu0
        %v463 = vadd.f32 0.0, %v462
        %v464 = vpop.f32.mrf.mxu0
        %465 = vmatprep.mubr.bf16.mxu0 0
        %466 = vmatmul.mubr.bf16.gmra.mxu0 %v354
        %v467 = vpop.f32.mrf.mxu0
        %v468 = vadd.f32 0.0, %v467
        %v469 = vpop.f32.mrf.mxu0
        %v470 = vpop.f32.mrf.mxu0
        %v471 = vadd.f32 0.0, %v470
        %v472 = vpop.f32.mrf.mxu0
        %473 = vmatprep.mubr.bf16.mxu0 0
        %474 = vmatmul.mubr.bf16.gmra.mxu0 %v355
        %v475 = vpop.f32.mrf.mxu0
        %v476 = vadd.f32 0.0, %v475
        %v477 = vpop.f32.mrf.mxu0
        %v478 = vpop.f32.mrf.mxu0
        %v479 = vadd.f32 0.0, %v478
        %v480 = vpop.f32.mrf.mxu0
        %481 = vmatprep.mubr.bf16.mxu0 0
        %482 = vmatmul.mubr.bf16.gmra.mxu0 %v356
        %v483 = vpop.f32.mrf.mxu0
        %v484 = vadd.f32 0.0, %v483
        %v485 = vpop.f32.mrf.mxu0
        %v486 = vpop.f32.mrf.mxu0
        %v487 = vadd.f32 0.0, %v486
        %v488 = vpop.f32.mrf.mxu0
        %489 = vdwg.mxu0
        %v494 = vunpack.c.l.b16 %v357
        %v495 = vunpack.c.l.b16 %v358
        %v496 = vunpack.c.l.b16 %v359
        %v497 = vunpack.c.l.b16 %v360
        %v498 = vpack.c.b16 %v495, %v494
        %v499 = vpack.c.b16 %v497, %v496
        %vm502 = vcmask 261120
        %v504 = vsel %vm502, %v341, 0
        %v507 = vsel %vm502, %v342, 0
        %v510 = vsel %vm502, %v343, 0
        %v513 = vsel %vm502, %v344, 0
        %515 = vmatprep.subr.bf16.mxu0 0
        %516 = vmatpush1.bf16.msra.mxu0 0
        %517 = vmatprep.subr.bf16.mxu0 0
        %518 = vmatpush1.bf16.msra.mxu0 0
        %519 = vmatprep.subr.bf16.mxu0 0
        %520 = vmatpush1.bf16.msra.mxu0 0
        %521 = vmatprep.subr.bf16.mxu0 0
        %522 = vmatpush1.bf16.msra.mxu0 0
        %523 = vmatprep.subr.bf16.mxu0 0
        %524 = vmatpush1.bf16.msra.mxu0 0
        %525 = vmatprep.subr.bf16.mxu0 0
        %526 = vmatpush1.bf16.msra.mxu0 0
        %527 = vmatprep.subr.bf16.mxu0 0
        %528 = vmatpush1.bf16.msra.mxu0 %v499
        %529 = vmatprep.subr.bf16.mxu0 0
        %530 = vmatpush1.bf16.msra.mxu0 %v498
        %531 = vmatprep.subr.bf16.mxu0 0
        %532 = vmatpush2.bf16.msra.mxu0 0
        %533 = vmatprep.subr.bf16.mxu0 0
        %534 = vmatpush2.bf16.msra.mxu0 0
        %535 = vmatprep.subr.bf16.mxu0 0
        %536 = vmatpush2.bf16.msra.mxu0 0
        %537 = vmatprep.subr.bf16.mxu0 0
        %538 = vmatpush2.bf16.msra.mxu0 0
        %539 = vmatprep.subr.bf16.mxu0 0
        %540 = vmatpush2.bf16.msra.mxu0 0
        %541 = vmatprep.subr.bf16.mxu0 0
        %542 = vmatpush2.bf16.msra.mxu0 0
        %543 = vmatprep.subr.bf16.mxu0 0
        %544 = vmatpush2.bf16.msra.mxu0 0
        %545 = vmatprep.subr.bf16.mxu0 0
        %546 = vmatpush2.bf16.msra.mxu0 0
        %547 = vmatprep.mubr.bf16.mxu0 0
        %548 = vmatmul.mubr.bf16.gmra.mxu0 %v504
        %v549 = vpop.f32.mrf.mxu0
        %v550 = vadd.f32 %v460, %v549
        %v551 = vpop.f32.mrf.mxu0
        %v552 = vpop.f32.mrf.mxu0
        %v553 = vadd.f32 %v463, %v552
        %v554 = vpop.f32.mrf.mxu0
        %555 = vmatprep.mubr.bf16.mxu0 0
        %556 = vmatmul.mubr.bf16.gmra.mxu0 %v507
        %v557 = vpop.f32.mrf.mxu0
        %v558 = vadd.f32 %v468, %v557
        %v559 = vpop.f32.mrf.mxu0
        %v560 = vpop.f32.mrf.mxu0
        %v561 = vadd.f32 %v471, %v560
        %v562 = vpop.f32.mrf.mxu0
        %563 = vmatprep.mubr.bf16.mxu0 0
        %564 = vmatmul.mubr.bf16.gmra.mxu0 %v510
        %v565 = vpop.f32.mrf.mxu0
        %v566 = vadd.f32 %v476, %v565
        %v567 = vpop.f32.mrf.mxu0
        %v568 = vpop.f32.mrf.mxu0
        %v569 = vadd.f32 %v479, %v568
        %v570 = vpop.f32.mrf.mxu0
        %571 = vmatprep.mubr.bf16.mxu0 0
        %572 = vmatmul.mubr.bf16.gmra.mxu0 %v513
        %v573 = vpop.f32.mrf.mxu0
        %v574 = vadd.f32 %v484, %v573
        %v575 = vpop.f32.mrf.mxu0
        %v576 = vpop.f32.mrf.mxu0
        %v577 = vadd.f32 %v487, %v576
        %v578 = vpop.f32.mrf.mxu0
        %579 = vdwg.mxu0
        %v580 = vld [vmem:[%s4] sm:$0x1]
        %v582 = vlaneseq
        %v583 = vshrl.u32 %v582, 7
        %v584 = vsub.s32 0, %v583
        %v585 = vrot.slane %v580, %v584
        %v587 = vadd.f32 %v550, %v585
        %v588 = vadd.f32 %v553, %v585
        %v589 = vadd.f32 %v558, %v585
        %v590 = vadd.f32 %v561, %v585
        %v591 = vadd.f32 %v566, %v585
        %v592 = vadd.f32 %v569, %v585
        %v593 = vadd.f32 %v574, %v585
        %v594 = vadd.f32 %v577, %v585
        %595 = vadd.xlane.f32.xlu0 %v587
        %v596 = vpop.xlane.xlu0 %595
        %597 = vadd.xlane.f32.xlu0 %v588
        %v598 = vpop.xlane.xlu0 %597
        %599 = vadd.xlane.f32.xlu0 %v589
        %v600 = vpop.xlane.xlu0 %599
        %601 = vadd.xlane.f32.xlu0 %v590
        %v602 = vpop.xlane.xlu0 %601
        %603 = vadd.xlane.f32.xlu0 %v591
        %v604 = vpop.xlane.xlu0 %603
        %605 = vadd.xlane.f32.xlu0 %v592
        %v606 = vpop.xlane.xlu0 %605
        %607 = vadd.xlane.f32.xlu0 %v593
        %v608 = vpop.xlane.xlu0 %607
        %609 = vadd.xlane.f32.xlu0 %v594
        %v610 = vpop.xlane.xlu0 %609
        %v611 = vrcp.pop 128.0
        %v612 = vmul.f32 %v596, %v611
        %v613 = vmul.f32 %v598, %v611
        %v614 = vmul.f32 %v600, %v611
        %v615 = vmul.f32 %v602, %v611
        %v616 = vmul.f32 %v604, %v611
        %v617 = vmul.f32 %v606, %v611
        %v618 = vmul.f32 %v608, %v611
        %v619 = vmul.f32 %v610, %v611
        %v620 = vsub.f32 %v587, %v612
        %v621 = vsub.f32 %v588, %v613
        %v622 = vsub.f32 %v589, %v614
        %v623 = vsub.f32 %v590, %v615
        %v624 = vsub.f32 %v591, %v616
        %v625 = vsub.f32 %v592, %v617
        %v626 = vsub.f32 %v593, %v618
        %v627 = vsub.f32 %v594, %v619
        %v628 = vmul.f32 %v620, %v620
        %v629 = vmul.f32 %v621, %v621
        %v630 = vmul.f32 %v622, %v622
        %v631 = vmul.f32 %v623, %v623
        %v632 = vmul.f32 %v624, %v624
        %v633 = vmul.f32 %v625, %v625
        %v634 = vmul.f32 %v626, %v626
        %v635 = vmul.f32 %v627, %v627
        %636 = vadd.xlane.f32.xlu0 %v628
        %v637 = vpop.xlane.xlu0 %636
        %638 = vadd.xlane.f32.xlu0 %v629
        %v639 = vpop.xlane.xlu0 %638
        %640 = vadd.xlane.f32.xlu0 %v630
        %v641 = vpop.xlane.xlu0 %640
        %642 = vadd.xlane.f32.xlu0 %v631
        %v643 = vpop.xlane.xlu0 %642
        %644 = vadd.xlane.f32.xlu0 %v632
        %v645 = vpop.xlane.xlu0 %644
        %646 = vadd.xlane.f32.xlu0 %v633
        %v647 = vpop.xlane.xlu0 %646
        %648 = vadd.xlane.f32.xlu0 %v634
        %v649 = vpop.xlane.xlu0 %648
        %650 = vadd.xlane.f32.xlu0 %v635
        %v651 = vpop.xlane.xlu0 %650
        %v652 = vmul.f32 %v637, %v611
        %v653 = vmul.f32 %v639, %v611
        %v654 = vmul.f32 %v641, %v611
        %v655 = vmul.f32 %v643, %v611
        %v656 = vmul.f32 %v645, %v611
        %v657 = vmul.f32 %v647, %v611
        %v658 = vmul.f32 %v649, %v611
        %v659 = vmul.f32 %v651, %v611
        %v660 = vadd.f32 %v652, 1e-05
        %v661 = vadd.f32 %v653, 1e-05
        %v662 = vadd.f32 %v654, 1e-05
        %v663 = vadd.f32 %v655, 1e-05
        %v664 = vadd.f32 %v656, 1e-05
        %v665 = vadd.f32 %v657, 1e-05
        %v666 = vadd.f32 %v658, 1e-05
        %v667 = vadd.f32 %v659, 1e-05
        %v668 = vrsqrt.pop %v660
        %v669 = vrsqrt.pop %v661
        %v670 = vrsqrt.pop %v662
        %v671 = vrsqrt.pop %v663
        %v672 = vrsqrt.pop %v664
        %v673 = vrsqrt.pop %v665
        %v674 = vrsqrt.pop %v666
        %v675 = vrsqrt.pop %v667
        %v676 = vmul.f32 %v620, %v668
        %v677 = vmul.f32 %v621, %v669
        %v678 = vmul.f32 %v622, %v670
        %v679 = vmul.f32 %v623, %v671
        %v680 = vmul.f32 %v624, %v672
        %v681 = vmul.f32 %v625, %v673
        %v682 = vmul.f32 %v626, %v674
        %v683 = vmul.f32 %v627, %v675
        %v684 = vpack.c.bf16 %v677, %v676
        %v685 = vpack.c.bf16 %v679, %v678
        %v686 = vpack.c.bf16 %v681, %v680
        %v687 = vpack.c.bf16 %v683, %v682
        %v688 = vld [vmem:[#allocation5] sm:$0xf]
        %v689 = vld [vmem:[#allocation5 + $0x4] sm:$0xf]
        %v690 = vld [vmem:[#allocation5 + $0x8] sm:$0xf]
        %v691 = vld [vmem:[#allocation5 + $0xc] sm:$0xf]
        %v692 = vld [vmem:[#allocation5 + $0x10] sm:$0xf]
        %v693 = vld [vmem:[#allocation5 + $0x14] sm:$0xf]
        %v694 = vld [vmem:[#allocation5 + $0x18] sm:$0xf]
        %v695 = vld [vmem:[#allocation5 + $0x1c] sm:$0xf]
        %v696 = vld [vmem:[#allocation5 + $0x20] sm:$0xf]
        %v697 = vld [vmem:[#allocation5 + $0x24] sm:$0xf]
        %v698 = vld [vmem:[#allocation5 + $0x28] sm:$0xf]
        %v699 = vld [vmem:[#allocation5 + $0x2c] sm:$0xf]
        %v700 = vld [vmem:[#allocation5 + $0x30] sm:$0xf]
        %v701 = vld [vmem:[#allocation5 + $0x34] sm:$0xf]
        %v702 = vld [vmem:[#allocation5 + $0x38] sm:$0xf]
        %v703 = vld [vmem:[#allocation5 + $0x3c] sm:$0xf]
        %v704 = vld [vmem:[%s6] sm:$0x1]
        %v706 = vlaneseq
        %v707 = vshrl.u32 %v706, 7
        %v708 = vsub.s32 0, %v707
        %v709 = vrot.slane %v704, %v708
        %v727 = vunpack.c.l.b16 %v688
        %v728 = vunpack.c.l.b16 %v689
        %v729 = vunpack.c.l.b16 %v690
        %v730 = vunpack.c.l.b16 %v691
        %v731 = vunpack.c.l.b16 %v692
        %v732 = vunpack.c.l.b16 %v693
        %v733 = vunpack.c.l.b16 %v694
        %v734 = vunpack.c.l.b16 %v695
        %v735 = vunpack.c.l.b16 %v696
        %v736 = vunpack.c.l.b16 %v697
        %v737 = vunpack.c.l.b16 %v698
        %v738 = vunpack.c.l.b16 %v699
        %v739 = vunpack.c.l.b16 %v700
        %v740 = vunpack.c.l.b16 %v701
        %v741 = vunpack.c.l.b16 %v702
        %v742 = vunpack.c.l.b16 %v703
        %v743 = vpack.c.b16 %v728, %v727
        %v744 = vpack.c.b16 %v730, %v729
        %v745 = vpack.c.b16 %v732, %v731
        %v746 = vpack.c.b16 %v734, %v733
        %v747 = vpack.c.b16 %v736, %v735
        %v748 = vpack.c.b16 %v738, %v737
        %v749 = vpack.c.b16 %v740, %v739
        %v750 = vpack.c.b16 %v742, %v741
        %759 = vmatprep.subr.bf16.mxu0 0
        %760 = vmatpush1.bf16.msra.mxu0 %v750
        %761 = vmatprep.subr.bf16.mxu0 0
        %762 = vmatpush1.bf16.msra.mxu0 %v749
        %763 = vmatprep.subr.bf16.mxu0 0
        %764 = vmatpush1.bf16.msra.mxu0 %v748
        %765 = vmatprep.subr.bf16.mxu0 0
        %766 = vmatpush1.bf16.msra.mxu0 %v747
        %767 = vmatprep.subr.bf16.mxu0 0
        %768 = vmatpush1.bf16.msra.mxu0 %v746
        %769 = vmatprep.subr.bf16.mxu0 0
        %770 = vmatpush1.bf16.msra.mxu0 %v745
        %771 = vmatprep.subr.bf16.mxu0 0
        %772 = vmatpush1.bf16.msra.mxu0 %v744
        %773 = vmatprep.subr.bf16.mxu0 0
        %774 = vmatpush1.bf16.msra.mxu0 %v743
        %775 = vmatprep.subr.bf16.mxu0 0
        %776 = vmatpush2.bf16.msra.mxu0 0
        %777 = vmatprep.subr.bf16.mxu0 0
        %778 = vmatpush2.bf16.msra.mxu0 0
        %779 = vmatprep.subr.bf16.mxu0 0
        %780 = vmatpush2.bf16.msra.mxu0 0
        %781 = vmatprep.subr.bf16.mxu0 0
        %782 = vmatpush2.bf16.msra.mxu0 0
        %783 = vmatprep.subr.bf16.mxu0 0
        %784 = vmatpush2.bf16.msra.mxu0 0
        %785 = vmatprep.subr.bf16.mxu0 0
        %786 = vmatpush2.bf16.msra.mxu0 0
        %787 = vmatprep.subr.bf16.mxu0 0
        %788 = vmatpush2.bf16.msra.mxu0 0
        %789 = vmatprep.subr.bf16.mxu0 0
        %790 = vmatpush2.bf16.msra.mxu0 0
        %791 = vmatprep.mubr.bf16.mxu0 0
        %792 = vmatmul.mubr.bf16.gmra.mxu0 %v684
        %v793 = vpop.f32.mrf.mxu0
        %v794 = vadd.f32 %v709, %v793
        %v795 = vpop.f32.mrf.mxu0
        %v796 = vpop.f32.mrf.mxu0
        %v797 = vadd.f32 %v709, %v796
        %v798 = vpop.f32.mrf.mxu0
        %799 = vmatprep.mubr.bf16.mxu0 0
        %800 = vmatmul.mubr.bf16.gmra.mxu0 %v685
        %v801 = vpop.f32.mrf.mxu0
        %v802 = vadd.f32 %v709, %v801
        %v803 = vpop.f32.mrf.mxu0
        %v804 = vpop.f32.mrf.mxu0
        %v805 = vadd.f32 %v709, %v804
        %v806 = vpop.f32.mrf.mxu0
        %807 = vmatprep.mubr.bf16.mxu0 0
        %808 = vmatmul.mubr.bf16.gmra.mxu0 %v686
        %v809 = vpop.f32.mrf.mxu0
        %v810 = vadd.f32 %v709, %v809
        %v811 = vpop.f32.mrf.mxu0
        %v812 = vpop.f32.mrf.mxu0
        %v813 = vadd.f32 %v709, %v812
        %v814 = vpop.f32.mrf.mxu0
        %815 = vmatprep.mubr.bf16.mxu0 0
        %816 = vmatmul.mubr.bf16.gmra.mxu0 %v687
        %v817 = vpop.f32.mrf.mxu0
        %v818 = vadd.f32 %v709, %v817
        %v819 = vpop.f32.mrf.mxu0
        %v820 = vpop.f32.mrf.mxu0
        %v821 = vadd.f32 %v709, %v820
        %v822 = vpop.f32.mrf.mxu0
        %823 = vdwg.mxu0
        %824 = vst [vmem:[%s318] sm:$0xff] %v794
        %825 = vst [vmem:[%s318 + $0x8] sm:$0xff] %v797
        %826 = vst [vmem:[%s318 + $0x10] sm:$0xff] %v802
        %827 = vst [vmem:[%s318 + $0x18] sm:$0xff] %v805
        %828 = vst [vmem:[%s318 + $0x20] sm:$0xff] %v810
        %829 = vst [vmem:[%s318 + $0x28] sm:$0xff] %v813
        %830 = vst [vmem:[%s318 + $0x30] sm:$0xff] %v818
        %831 = vst [vmem:[%s318 + $0x38] sm:$0xff] %v821
        %s832 = sand.u32 %s188, 1
        %s833 = scalar_lea.sflag [#allocation4], %s832
        %s834 = sand.u32 %s188, 1
        %s835 = smul.addr %s834, 64
        %s836 = scalar_lea.vmem [#allocation7], %s835
        // Predicated region
        $region57: #{tpu_custom_call.1} parent=47 // pred_check
          %p837 = pneg %p198
        $region58: #{tpu_custom_call.1} parent=47 // pred_check_branch
          %839 = sbr.rel (%p837) target = $region60
        $region59: #{tpu_custom_call.1} parent=47 // pred_region
          %s840 = smul.u32 8, %s23
          %s842 = ssub.s32 1024, 1024
          %843 = vsyncadd %s833, %s842
          %s844 = smul.addr %s840, 128
          %s845 = scalar_lea.hbm %s7, %s844
          %s846 = sshll.u32 %s836, 4
          %s847 = int_to_ptr.vmem [resolvable:$true] %s846
          %852 = dma.vmem_to_hbm [thread:$0]  %s847, 1024, %s845, %s833, 128, 128, 8
        $region60: #{tpu_custom_call.1} parent=47 // pred_fallthru
          _
      $region48: #{tpu_custom_call.1} parent=5 // pred_fallthru
        _
      %p853 = scmp.le.s32.totalorder 2, %s18
      // Predicated region
      $region61: #{tpu_custom_call.1} parent=5 // pred_check
        %p854 = pneg %p853
      $region62: #{tpu_custom_call.1} parent=5 // pred_check_branch
        %856 = sbr.rel (%p854) target = $region64
      $region63: #{tpu_custom_call.1} parent=5 // pred_region
        %s857 = ssub.s32 %s18, 2
        // Predicated region
        $region65: #{tpu_custom_call.1} parent=63 // pred_check
          %p858 = pneg %p204
        $region66: #{tpu_custom_call.1} parent=63 // pred_check_branch
          %860 = sbr.rel (%p858) target = $region68
        $region67: #{tpu_custom_call.1} parent=63 // pred_region
          %s861 = sand.u32 %s189, 1
          %s862 = scalar_lea.sflag [#allocation4], %s861
          %s863 = sand.u32 %s189, 1
          %s864 = smul.addr %s863, 64
          %s865 = scalar_lea.vmem [#allocation7], %s864
          %866 = dma.done %s862, 1024
        $region68: #{tpu_custom_call.1} parent=63 // pred_fallthru
          _
      $region64: #{tpu_custom_call.1} parent=5 // pred_fallthru
        _
    $region6: #{tpu_custom_call.1} parent=1 // loop_footer
      %s22 = sadd.s32 1, %s18
    $region7: #{tpu_custom_call.1} parent=1 // loop_footer_branch
      %17 = sbr.rel target = $region3
    $region8: #{tpu_custom_call.1} parent=1 // loop_exit
      _
    %867 = vsyncpa [#allocation3], 1
    %s868 = scalar_lea.sflag [#allocation3], 1
    %869 = vsyncpa %s868, 1
    %870 = vsyncpa [#allocation6], 1
    %871 = vsyncpa [#allocation4], 1
    %s872 = scalar_lea.sflag [#allocation4], 1
    %873 = vsyncpa %s872, 1

</llo_original>
